<compile_context>
chip_gen: v6e
topology: v6e:2x2x1
jax: 0.10.0
libtpu: 0.0.40
codegen_flags: <defaults>
</compile_context>

<pallas_src>
import jax
import jax.numpy as jnp
from jax.experimental import pallas as pl
from jax.experimental.pallas import tpu as pltpu

HIDDEN = 48      # fixed by the module
HP = 128         # lane-padded hidden size: one 128-lane group per gate


def _round_up(n, m):
    return (n + m - 1) // m * m


def _lstm_fused_kernel(x_ref,      # (B, T, D)        f32  raw batch-first input
                       blob_ref,   # (R, 4*HP)        f32  wih | bias | w_eff | b_out
                       whh_ref,    # (HP, 4*HP)       bf16 recurrent weights
                       w3_ref,     # (T, P)           f32  fc3 weight, one row per step
                       out_ref,    # (B, P)           f32
                       xp_ref):    # (B, T, 4*HP)     f32  VMEM scratch for x-projection
    B, T, D = x_ref.shape
    _, P = w3_ref.shape
    G = 4 * HP

    # ---- one-time work, off the recurrence --------------------------------
    wih = blob_ref[0:D, :]                    # (D, G)
    bias = blob_ref[D:D + 1, :]               # (1, G)   b_ih + b_hh, gate-lane-padded
    w_eff = blob_ref[D + 1:D + 2, 0:HP]       # (1, HP)  folded fc @ fc2 weight
    b_out = blob_ref[D + 2:D + 3, 0:P]        # (1, P)   folded fc/fc2/fc3 bias

    # Hoisted input projection for all timesteps: one MXU pass, result parked in a
    # VMEM scratch so the unrolled recurrence does not hold 32 vregs live.
    xbt = x_ref[...].reshape(B * T, D)                                      # free reshape
    xp = jnp.dot(xbt, wih, preferred_element_type=jnp.float32) + bias      # (B*T, G)
    xp_ref[...] = xp.reshape(B, T, G)

    # Recurrent weights in bf16 (native MXU dtype); result is popped as f32.
    whh = whh_ref[...]                        # (HP, G) bf16

    h = jnp.zeros((B, HP), jnp.float32)       # h0 = zeros (as in the module)
    c = jnp.zeros((B, HP), jnp.float32)       # c0 = zeros
    acc = jnp.broadcast_to(b_out, (B, P))     # folded (fc, fc2, fc3) bias

    # T is small and static -> fully unrolled recurrence.
    # TODO(synk): whh could be staged once in the MXU weight registers via
    #             pltpu.matmul_push_rhs / matmul_acc_lhs / matmul_pop to avoid
    #             re-pushing the RHS every step; not done here for robustness.
    for t in range(T):
        # Per-step x-projection slice: a small VMEM load, off the critical path.
        xt = xp_ref[:, t:t + 1, :].reshape(B, G)                            # (B, G)
        # Critical path: single bf16 MXU matmul per step, f32 accumulation.
        gates = xt + jnp.dot(h.astype(jnp.bfloat16), whh,
                             preferred_element_type=jnp.float32)            # (B, G)
        # PyTorch gate order: input, forget, cell(g), output — each its own lane group.
        i_g = jax.nn.sigmoid(gates[:, 0 * HP:1 * HP])
        f_g = jax.nn.sigmoid(gates[:, 1 * HP:2 * HP])
        g_g = jnp.tanh(gates[:, 2 * HP:3 * HP])
        o_g = jax.nn.sigmoid(gates[:, 3 * HP:4 * HP])
        c = f_g * c + i_g * g_g
        h = o_g * jnp.tanh(c)
        # Folded fc -> fc2 -> squeeze -> fc3 head as a rank-1 update:
        #   s_t = h_t . w_eff (XLU lane reduce), acc += s_t * w3[:, t] (VPU).
        s = jnp.sum(h * w_eff, axis=1, keepdims=True)                       # (B, 1)
        acc = acc + s * w3_ref[t:t + 1, :]                                  # (B, P)

    out_ref[...] = acc


def prepare_params(params):
    """One-time parameter repack/fold (plain XLA, done once outside the hot path)."""
    H = HIDDEN
    D = params["w_ih"].shape[1]
    P, T = params["w_fc3"].shape

    def pad_gate_cols(w):   # (rows, 4H) -> (rows, 4*HP): each gate in its own lane group
        rows = w.shape[0]
        return jnp.pad(w.reshape(rows, 4, H),
                       ((0, 0), (0, 0), (0, HP - H))).reshape(rows, 4 * HP)

    wih_pad = pad_gate_cols(params["w_ih"].T.astype(jnp.float32))                  # (D, 4*HP)
    whh_pad = jnp.pad(pad_gate_cols(params["w_hh"].T.astype(jnp.float32)),
                      ((0, HP - H), (0, 0)))                                       # (HP, 4*HP)
    bias_pad = pad_gate_cols(
        (params["b_ih"] + params["b_hh"]).reshape(1, 4 * H).astype(jnp.float32))   # (1, 4*HP)

    # Fold fc -> fc2:  y_t = h_t @ w_eff + b_eff
    w_eff = jnp.sum(params["w_fc1"] * params["w_fc2"].T, axis=0)                   # (H,)
    b_eff = jnp.sum(params["b_fc1"] * params["w_fc2"][0]) + params["b_fc2"][0]     # scalar
    # Fold fc3:  out[b, p] = sum_t y_t[b] * w3[p, t] + b3[p]
    w3 = params["w_fc3"].astype(jnp.float32)                                       # (P, T)
    b_out = b_eff * jnp.sum(w3, axis=1) + params["b_fc3"].astype(jnp.float32)      # (P,)

    # Pack wih + biases + folded head vectors into one fp32 blob (fewer DMAs).
    rows = _round_up(D + 3, 8)
    blob = jnp.zeros((rows, 4 * HP), jnp.float32)
    blob = blob.at[0:D].set(wih_pad)
    blob = blob.at[D].set(bias_pad[0])
    blob = blob.at[D + 1, 0:H].set(w_eff.astype(jnp.float32))
    blob = blob.at[D + 2, 0:P].set(b_out)
    return {
        "blob": blob,                                    # (R, 4*HP) f32
        "whh": whh_pad.astype(jnp.bfloat16),             # (HP, 4*HP) bf16 — MXU operand
        "w3t": jnp.transpose(w3).astype(jnp.float32),    # (T, P) f32 — row t = w3[:, t]
    }


def model_forward(seq_x, seq_xt, past_x, past_xt, dec_input, seq_yt, prepped):
    """Mirrors Model.forward; only seq_x is used (matching the PyTorch code)."""
    del seq_xt, past_x, past_xt, dec_input, seq_yt
    B, T, D = seq_x.shape
    assert B > 1, "B == 1 changes torch.squeeze semantics; only B > 1 is implemented"
    blob, whh, w3t = prepped["blob"], prepped["whh"], prepped["w3t"]
    P = w3t.shape[1]

    vmem = pl.BlockSpec(memory_space=pltpu.MemorySpace.VMEM)
    # TODO(synk): for large batch, add a batch grid axis with
    #             dimension_semantics=("parallel",) so v7x's second TensorCore is used.
    return pl.pallas_call(
        _lstm_fused_kernel,
        out_shape=jax.ShapeDtypeStruct((B, P), jnp.float32),
        in_specs=[vmem, vmem, vmem, vmem],
        out_specs=vmem,
        scratch_shapes=[pltpu.VMEM((B, T, 4 * HP), jnp.float32)],
    )(seq_x.astype(jnp.float32), blob, whh, w3t)


def init_params(key, input_size, hidden, seq_len, pred_len):
    """Deterministic parameter init (same shapes as the PyTorch module)."""
    ks = jax.random.split(key, 10)
    s = 1.0 / jnp.sqrt(hidden)
    u = lambda k, shape, scale: jax.random.uniform(k, shape, jnp.float32, -scale, scale)
    return {
        # nn.LSTM (num_layers=1, unidirectional)
        "w_ih": u(ks[0], (4 * hidden, input_size), s),
        "w_hh": u(ks[1], (4 * hidden, hidden), s),
        "b_ih": u(ks[2], (4 * hidden,), s),
        "b_hh": u(ks[3], (4 * hidden,), s),
        # fc: hidden -> hidden // 2
        "w_fc1": u(ks[4], (hidden // 2, hidden), 1.0 / jnp.sqrt(hidden)),
        "b_fc1": u(ks[5], (hidden // 2,), 1.0 / jnp.sqrt(hidden)),
        # fc2: hidden // 2 -> 1
        "w_fc2": u(ks[6], (1, hidden // 2), 1.0 / jnp.sqrt(hidden // 2)),
        "b_fc2": u(ks[7], (1,), 1.0 / jnp.sqrt(hidden // 2)),
        # fc3: seq_len -> pred_len
        "w_fc3": u(ks[8], (pred_len, seq_len), 1.0 / jnp.sqrt(seq_len)),
        "b_fc3": u(ks[9], (pred_len,), 1.0 / jnp.sqrt(seq_len)),
    }


def _reference_forward(seq_x, params):
    """Pure-JAX reference of the PyTorch forward (B > 1), for a numerical sanity check."""
    B, T, D = seq_x.shape
    H = params["w_hh"].shape[1]
    wih, whh = params["w_ih"], params["w_hh"]
    b = params["b_ih"] + params["b_hh"]
    h = jnp.zeros((B, H), jnp.float32)
    c = jnp.zeros((B, H), jnp.float32)
    hs = []
    for t in range(T):
        gates = seq_x[:, t, :] @ wih.T + h @ whh.T + b
        i = jax.nn.sigmoid(gates[:, 0 * H:1 * H])
        f = jax.nn.sigmoid(gates[:, 1 * H:2 * H])
        g = jnp.tanh(gates[:, 2 * H:3 * H])
        o = jax.nn.sigmoid(gates[:, 3 * H:4 * H])
        c = f * c + i * g
        h = o * jnp.tanh(c)
        hs.append(h)
    hseq = jnp.stack(hs, axis=1)                                            # (B, T, H)
    z = hseq @ params["w_fc1"].T + params["b_fc1"]
    y = jnp.squeeze(z @ params["w_fc2"].T + params["b_fc2"], axis=-1)       # (B, T)
    return y @ params["w_fc3"].T + params["b_fc3"]                          # (B, P)


if __name__ == "__main__":
    # Small shapes consistent with the module's forward pass.
    B, T, D = 2, 8, 16        # batch, seq_len, input_size
    PRED = 4                  # pred_len

    key = jax.random.PRNGKey(0)
    k_p, k_x = jax.random.split(key)
    params = init_params(k_p, D, HIDDEN, T, PRED)

    seq_x = jax.random.normal(k_x, (B, T, D), jnp.float32)
    # Unused-by-forward auxiliary inputs (kept for signature parity).
    seq_xt = jnp.zeros((B, T, 4), jnp.float32)
    past_x = jnp.zeros((B, 4, D), jnp.float32)
    past_xt = jnp.zeros((B, 4, 4), jnp.float32)
    dec_input = jnp.zeros((B, PRED, D), jnp.float32)
    seq_yt = jnp.zeros((B, PRED, 4), jnp.float32)

    prepped = prepare_params(params)          # one-time parameter fold/pack
    fwd = jax.jit(model_forward)              # jitted per-call wrapper (no layout glue)

    out = fwd(seq_x, seq_xt, past_x, past_xt, dec_input, seq_yt, prepped)
    out = jax.block_until_ready(out)
    assert out.shape == (B, PRED), out.shape

    # Numerical sanity check against the unfused pure-JAX fp32 reference.
    with jax.default_matmul_precision("float32"):
        ref = _reference_forward(seq_x, params)
    err = float(jnp.max(jnp.abs(out - ref)))
    assert err < 5e-3, f"max abs err {err}"
    print("KERNEL_OK")
</pallas_src>

<mosaic_0001>
module attributes {stable_mosaic.version = 11 : i64} {
  func.func @_lstm_fused_kernel(%arg0: memref<2x8x16xf32, #tpu.memory_space<vmem>>, %arg1: memref<24x512xf32, #tpu.memory_space<vmem>>, %arg2: memref<128x512xbf16, #tpu.memory_space<vmem>>, %arg3: memref<8x4xf32, #tpu.memory_space<vmem>>, %arg4: memref<2x4xf32, #tpu.memory_space<vmem>>, %arg5: memref<2x8x512xf32, #tpu.memory_space<vmem>>) attributes {dimension_semantics = [], scalar_prefetch = 0 : i64, scratch_operands = 1 : i64, tpu.core_type = #tpu.core_type<tc>} {
    %c0 = arith.constant 0 : index
    %c0_0 = arith.constant 0 : index
    %0 = vector.load %arg1[%c0, %c0_0] : memref<24x512xf32, #tpu.memory_space<vmem>>, vector<16x512xf32>
    %c16 = arith.constant 16 : index
    %c0_1 = arith.constant 0 : index
    %1 = vector.load %arg1[%c16, %c0_1] : memref<24x512xf32, #tpu.memory_space<vmem>>, vector<1x512xf32>
    %c17 = arith.constant 17 : index
    %c0_2 = arith.constant 0 : index
    %2 = vector.load %arg1[%c17, %c0_2] : memref<24x512xf32, #tpu.memory_space<vmem>>, vector<1x128xf32>
    %c18 = arith.constant 18 : index
    %c0_3 = arith.constant 0 : index
    %3 = vector.load %arg1[%c18, %c0_3] : memref<24x512xf32, #tpu.memory_space<vmem>>, vector<1x4xf32>
    %c0_4 = arith.constant 0 : index
    %c0_5 = arith.constant 0 : index
    %c0_6 = arith.constant 0 : index
    %4 = vector.load %arg0[%c0_4, %c0_5, %c0_6] : memref<2x8x16xf32, #tpu.memory_space<vmem>>, vector<2x8x16xf32>
    %5 = vector.shape_cast %4 : vector<2x8x16xf32> to vector<16x16xf32>
    %cst = arith.constant dense<0.000000e+00> : vector<16x512xf32>
    %6 = tpu.matmul %5, %0, %cst {dimension_numbers = #tpu.dot_dimension_numbers<[1], [0], [0], [1], [0, 0, 1, 1], [], []>} : vector<16x16xf32>, vector<16x512xf32>, vector<16x512xf32> -> vector<16x512xf32>
    %7 = vector.broadcast %1 : vector<1x512xf32> to vector<16x512xf32>
    %8 = arith.addf %6, %7 : vector<16x512xf32>
    %9 = vector.shape_cast %8 : vector<16x512xf32> to vector<2x8x512xf32>
    %c0_7 = arith.constant 0 : index
    %c0_8 = arith.constant 0 : index
    %c0_9 = arith.constant 0 : index
    %10 = vector.load %arg5[%c0_7, %c0_8, %c0_9] : memref<2x8x512xf32, #tpu.memory_space<vmem>>, vector<2x8x512xf32>
    tpu.vector_store %arg5[%c0_7, %c0_8, %c0_9], %9 {strides = array<i32>} : memref<2x8x512xf32, #tpu.memory_space<vmem>>, vector<2x8x512xf32>,
    %c0_10 = arith.constant 0 : index
    %c0_11 = arith.constant 0 : index
    %11 = vector.load %arg2[%c0_10, %c0_11] : memref<128x512xbf16, #tpu.memory_space<vmem>>, vector<128x512xbf16>
    %cst_12 = arith.constant 0.000000e+00 : f32
    %12 = vector.broadcast %cst_12 : f32 to vector<2x128xf32>
    %cst_13 = arith.constant 0.000000e+00 : f32
    %13 = vector.broadcast %cst_13 : f32 to vector<2x128xf32>
    %14 = vector.shape_cast %3 : vector<1x4xf32> to vector<1x4xf32>
    %15 = vector.broadcast %14 : vector<1x4xf32> to vector<2x4xf32>
    %c0_14 = arith.constant 0 : index
    %c0_15 = arith.constant 0 : index
    %c0_16 = arith.constant 0 : index
    %16 = vector.load %arg5[%c0_14, %c0_15, %c0_16] : memref<2x8x512xf32, #tpu.memory_space<vmem>>, vector<2x1x512xf32>
    %17 = vector.shape_cast %16 : vector<2x1x512xf32> to vector<2x512xf32>
    %18 = arith.truncf %12 : vector<2x128xf32> to vector<2x128xbf16>
    %cst_17 = arith.constant dense<0.000000e+00> : vector<2x512xf32>
    %19 = tpu.matmul %18, %11, %cst_17 {dimension_numbers = #tpu.dot_dimension_numbers<[1], [0], [0], [1], [0, 0, 1, 1], [], []>} : vector<2x128xbf16>, vector<128x512xbf16>, vector<2x512xf32> -> vector<2x512xf32>
    %20 = arith.addf %17, %19 : vector<2x512xf32>
    %21 = vector.extract_strided_slice %20 {offsets = [0, 0], sizes = [2, 128], strides = [1, 1]} : vector<2x512xf32> to vector<2x128xf32>
    %22 = arith.negf %21 : vector<2x128xf32>
    %23 = math.exp %22 : vector<2x128xf32>
    %cst_18 = arith.constant 1.000000e+00 : f32
    %24 = vector.broadcast %cst_18 : f32 to vector<2x128xf32>
    %25 = arith.addf %24, %23 : vector<2x128xf32>
    %26 = arith.divf %24, %25 : vector<2x128xf32>
    %27 = vector.extract_strided_slice %20 {offsets = [0, 128], sizes = [2, 128], strides = [1, 1]} : vector<2x512xf32> to vector<2x128xf32>
    %28 = arith.negf %27 : vector<2x128xf32>
    %29 = math.exp %28 : vector<2x128xf32>
    %cst_19 = arith.constant 1.000000e+00 : f32
    %30 = vector.broadcast %cst_19 : f32 to vector<2x128xf32>
    %31 = arith.addf %30, %29 : vector<2x128xf32>
    %32 = arith.divf %30, %31 : vector<2x128xf32>
    %33 = vector.extract_strided_slice %20 {offsets = [0, 256], sizes = [2, 128], strides = [1, 1]} : vector<2x512xf32> to vector<2x128xf32>
    %34 = math.tanh %33 : vector<2x128xf32>
    %35 = vector.extract_strided_slice %20 {offsets = [0, 384], sizes = [2, 128], strides = [1, 1]} : vector<2x512xf32> to vector<2x128xf32>
    %36 = arith.negf %35 : vector<2x128xf32>
    %37 = math.exp %36 : vector<2x128xf32>
    %cst_20 = arith.constant 1.000000e+00 : f32
    %38 = vector.broadcast %cst_20 : f32 to vector<2x128xf32>
    %39 = arith.addf %38, %37 : vector<2x128xf32>
    %40 = arith.divf %38, %39 : vector<2x128xf32>
    %41 = arith.mulf %32, %13 : vector<2x128xf32>
    %42 = arith.mulf %26, %34 : vector<2x128xf32>
    %43 = arith.addf %41, %42 : vector<2x128xf32>
    %44 = math.tanh %43 : vector<2x128xf32>
    %45 = arith.mulf %40, %44 : vector<2x128xf32>
    %46 = vector.broadcast %2 : vector<1x128xf32> to vector<2x128xf32>
    %47 = arith.mulf %45, %46 : vector<2x128xf32>
    %cst_21 = arith.constant dense<0.000000e+00> : vector<2xf32>
    %48 = vector.multi_reduction <add>, %47, %cst_21 [1] : vector<2x128xf32> to vector<2xf32>
    %49 = vector.shape_cast %48 : vector<2xf32> to vector<2x1xf32>
    %c0_22 = arith.constant 0 : index
    %c0_23 = arith.constant 0 : index
    %50 = vector.load %arg3[%c0_22, %c0_23] : memref<8x4xf32, #tpu.memory_space<vmem>>, vector<1x4xf32>
    %51 = vector.broadcast %49 : vector<2x1xf32> to vector<2x4xf32>
    %52 = vector.broadcast %50 : vector<1x4xf32> to vector<2x4xf32>
    %53 = arith.mulf %51, %52 : vector<2x4xf32>
    %54 = arith.addf %15, %53 : vector<2x4xf32>
    %c0_24 = arith.constant 0 : index
    %c1 = arith.constant 1 : index
    %c0_25 = arith.constant 0 : index
    %55 = vector.load %arg5[%c0_24, %c1, %c0_25] : memref<2x8x512xf32, #tpu.memory_space<vmem>>, vector<2x1x512xf32>
    %56 = vector.shape_cast %55 : vector<2x1x512xf32> to vector<2x512xf32>
    %57 = arith.truncf %45 : vector<2x128xf32> to vector<2x128xbf16>
    %cst_26 = arith.constant dense<0.000000e+00> : vector<2x512xf32>
    %58 = tpu.matmul %57, %11, %cst_26 {dimension_numbers = #tpu.dot_dimension_numbers<[1], [0], [0], [1], [0, 0, 1, 1], [], []>} : vector<2x128xbf16>, vector<128x512xbf16>, vector<2x512xf32> -> vector<2x512xf32>
    %59 = arith.addf %56, %58 : vector<2x512xf32>
    %60 = vector.extract_strided_slice %59 {offsets = [0, 0], sizes = [2, 128], strides = [1, 1]} : vector<2x512xf32> to vector<2x128xf32>
    %61 = arith.negf %60 : vector<2x128xf32>
    %62 = math.exp %61 : vector<2x128xf32>
    %cst_27 = arith.constant 1.000000e+00 : f32
    %63 = vector.broadcast %cst_27 : f32 to vector<2x128xf32>
    %64 = arith.addf %63, %62 : vector<2x128xf32>
    %65 = arith.divf %63, %64 : vector<2x128xf32>
    %66 = vector.extract_strided_slice %59 {offsets = [0, 128], sizes = [2, 128], strides = [1, 1]} : vector<2x512xf32> to vector<2x128xf32>
    %67 = arith.negf %66 : vector<2x128xf32>
    %68 = math.exp %67 : vector<2x128xf32>
    %cst_28 = arith.constant 1.000000e+00 : f32
    %69 = vector.broadcast %cst_28 : f32 to vector<2x128xf32>
    %70 = arith.addf %69, %68 : vector<2x128xf32>
    %71 = arith.divf %69, %70 : vector<2x128xf32>
    %72 = vector.extract_strided_slice %59 {offsets = [0, 256], sizes = [2, 128], strides = [1, 1]} : vector<2x512xf32> to vector<2x128xf32>
    %73 = math.tanh %72 : vector<2x128xf32>
    %74 = vector.extract_strided_slice %59 {offsets = [0, 384], sizes = [2, 128], strides = [1, 1]} : vector<2x512xf32> to vector<2x128xf32>
    %75 = arith.negf %74 : vector<2x128xf32>
    %76 = math.exp %75 : vector<2x128xf32>
    %cst_29 = arith.constant 1.000000e+00 : f32
    %77 = vector.broadcast %cst_29 : f32 to vector<2x128xf32>
    %78 = arith.addf %77, %76 : vector<2x128xf32>
    %79 = arith.divf %77, %78 : vector<2x128xf32>
    %80 = arith.mulf %71, %43 : vector<2x128xf32>
    %81 = arith.mulf %65, %73 : vector<2x128xf32>
    %82 = arith.addf %80, %81 : vector<2x128xf32>
    %83 = math.tanh %82 : vector<2x128xf32>
    %84 = arith.mulf %79, %83 : vector<2x128xf32>
    %85 = vector.broadcast %2 : vector<1x128xf32> to vector<2x128xf32>
    %86 = arith.mulf %84, %85 : vector<2x128xf32>
    %cst_30 = arith.constant dense<0.000000e+00> : vector<2xf32>
    %87 = vector.multi_reduction <add>, %86, %cst_30 [1] : vector<2x128xf32> to vector<2xf32>
    %88 = vector.shape_cast %87 : vector<2xf32> to vector<2x1xf32>
    %c1_31 = arith.constant 1 : index
    %c0_32 = arith.constant 0 : index
    %89 = vector.load %arg3[%c1_31, %c0_32] : memref<8x4xf32, #tpu.memory_space<vmem>>, vector<1x4xf32>
    %90 = vector.broadcast %88 : vector<2x1xf32> to vector<2x4xf32>
    %91 = vector.broadcast %89 : vector<1x4xf32> to vector<2x4xf32>
    %92 = arith.mulf %90, %91 : vector<2x4xf32>
    %93 = arith.addf %54, %92 : vector<2x4xf32>
    %c0_33 = arith.constant 0 : index
    %c2 = arith.constant 2 : index
    %c0_34 = arith.constant 0 : index
    %94 = vector.load %arg5[%c0_33, %c2, %c0_34] : memref<2x8x512xf32, #tpu.memory_space<vmem>>, vector<2x1x512xf32>
    %95 = vector.shape_cast %94 : vector<2x1x512xf32> to vector<2x512xf32>
    %96 = arith.truncf %84 : vector<2x128xf32> to vector<2x128xbf16>
    %cst_35 = arith.constant dense<0.000000e+00> : vector<2x512xf32>
    %97 = tpu.matmul %96, %11, %cst_35 {dimension_numbers = #tpu.dot_dimension_numbers<[1], [0], [0], [1], [0, 0, 1, 1], [], []>} : vector<2x128xbf16>, vector<128x512xbf16>, vector<2x512xf32> -> vector<2x512xf32>
    %98 = arith.addf %95, %97 : vector<2x512xf32>
    %99 = vector.extract_strided_slice %98 {offsets = [0, 0], sizes = [2, 128], strides = [1, 1]} : vector<2x512xf32> to vector<2x128xf32>
    %100 = arith.negf %99 : vector<2x128xf32>
    %101 = math.exp %100 : vector<2x128xf32>
    %cst_36 = arith.constant 1.000000e+00 : f32
    %102 = vector.broadcast %cst_36 : f32 to vector<2x128xf32>
    %103 = arith.addf %102, %101 : vector<2x128xf32>
    %104 = arith.divf %102, %103 : vector<2x128xf32>
    %105 = vector.extract_strided_slice %98 {offsets = [0, 128], sizes = [2, 128], strides = [1, 1]} : vector<2x512xf32> to vector<2x128xf32>
    %106 = arith.negf %105 : vector<2x128xf32>
    %107 = math.exp %106 : vector<2x128xf32>
    %cst_37 = arith.constant 1.000000e+00 : f32
    %108 = vector.broadcast %cst_37 : f32 to vector<2x128xf32>
    %109 = arith.addf %108, %107 : vector<2x128xf32>
    %110 = arith.divf %108, %109 : vector<2x128xf32>
    %111 = vector.extract_strided_slice %98 {offsets = [0, 256], sizes = [2, 128], strides = [1, 1]} : vector<2x512xf32> to vector<2x128xf32>
    %112 = math.tanh %111 : vector<2x128xf32>
    %113 = vector.extract_strided_slice %98 {offsets = [0, 384], sizes = [2, 128], strides = [1, 1]} : vector<2x512xf32> to vector<2x128xf32>
    %114 = arith.negf %113 : vector<2x128xf32>
    %115 = math.exp %114 : vector<2x128xf32>
    %cst_38 = arith.constant 1.000000e+00 : f32
    %116 = vector.broadcast %cst_38 : f32 to vector<2x128xf32>
    %117 = arith.addf %116, %115 : vector<2x128xf32>
    %118 = arith.divf %116, %117 : vector<2x128xf32>
    %119 = arith.mulf %110, %82 : vector<2x128xf32>
    %120 = arith.mulf %104, %112 : vector<2x128xf32>
    %121 = arith.addf %119, %120 : vector<2x128xf32>
    %122 = math.tanh %121 : vector<2x128xf32>
    %123 = arith.mulf %118, %122 : vector<2x128xf32>
    %124 = vector.broadcast %2 : vector<1x128xf32> to vector<2x128xf32>
    %125 = arith.mulf %123, %124 : vector<2x128xf32>
    %cst_39 = arith.constant dense<0.000000e+00> : vector<2xf32>
    %126 = vector.multi_reduction <add>, %125, %cst_39 [1] : vector<2x128xf32> to vector<2xf32>
    %127 = vector.shape_cast %126 : vector<2xf32> to vector<2x1xf32>
    %c2_40 = arith.constant 2 : index
    %c0_41 = arith.constant 0 : index
    %128 = vector.load %arg3[%c2_40, %c0_41] : memref<8x4xf32, #tpu.memory_space<vmem>>, vector<1x4xf32>
    %129 = vector.broadcast %127 : vector<2x1xf32> to vector<2x4xf32>
    %130 = vector.broadcast %128 : vector<1x4xf32> to vector<2x4xf32>
    %131 = arith.mulf %129, %130 : vector<2x4xf32>
    %132 = arith.addf %93, %131 : vector<2x4xf32>
    %c0_42 = arith.constant 0 : index
    %c3 = arith.constant 3 : index
    %c0_43 = arith.constant 0 : index
    %133 = vector.load %arg5[%c0_42, %c3, %c0_43] : memref<2x8x512xf32, #tpu.memory_space<vmem>>, vector<2x1x512xf32>
    %134 = vector.shape_cast %133 : vector<2x1x512xf32> to vector<2x512xf32>
    %135 = arith.truncf %123 : vector<2x128xf32> to vector<2x128xbf16>
    %cst_44 = arith.constant dense<0.000000e+00> : vector<2x512xf32>
    %136 = tpu.matmul %135, %11, %cst_44 {dimension_numbers = #tpu.dot_dimension_numbers<[1], [0], [0], [1], [0, 0, 1, 1], [], []>} : vector<2x128xbf16>, vector<128x512xbf16>, vector<2x512xf32> -> vector<2x512xf32>
    %137 = arith.addf %134, %136 : vector<2x512xf32>
    %138 = vector.extract_strided_slice %137 {offsets = [0, 0], sizes = [2, 128], strides = [1, 1]} : vector<2x512xf32> to vector<2x128xf32>
    %139 = arith.negf %138 : vector<2x128xf32>
    %140 = math.exp %139 : vector<2x128xf32>
    %cst_45 = arith.constant 1.000000e+00 : f32
    %141 = vector.broadcast %cst_45 : f32 to vector<2x128xf32>
    %142 = arith.addf %141, %140 : vector<2x128xf32>
    %143 = arith.divf %141, %142 : vector<2x128xf32>
    %144 = vector.extract_strided_slice %137 {offsets = [0, 128], sizes = [2, 128], strides = [1, 1]} : vector<2x512xf32> to vector<2x128xf32>
    %145 = arith.negf %144 : vector<2x128xf32>
    %146 = math.exp %145 : vector<2x128xf32>
    %cst_46 = arith.constant 1.000000e+00 : f32
    %147 = vector.broadcast %cst_46 : f32 to vector<2x128xf32>
    %148 = arith.addf %147, %146 : vector<2x128xf32>
    %149 = arith.divf %147, %148 : vector<2x128xf32>
    %150 = vector.extract_strided_slice %137 {offsets = [0, 256], sizes = [2, 128], strides = [1, 1]} : vector<2x512xf32> to vector<2x128xf32>
    %151 = math.tanh %150 : vector<2x128xf32>
    %152 = vector.extract_strided_slice %137 {offsets = [0, 384], sizes = [2, 128], strides = [1, 1]} : vector<2x512xf32> to vector<2x128xf32>
    %153 = arith.negf %152 : vector<2x128xf32>
    %154 = math.exp %153 : vector<2x128xf32>
    %cst_47 = arith.constant 1.000000e+00 : f32
    %155 = vector.broadcast %cst_47 : f32 to vector<2x128xf32>
    %156 = arith.addf %155, %154 : vector<2x128xf32>
    %157 = arith.divf %155, %156 : vector<2x128xf32>
    %158 = arith.mulf %149, %121 : vector<2x128xf32>
    %159 = arith.mulf %143, %151 : vector<2x128xf32>
    %160 = arith.addf %158, %159 : vector<2x128xf32>
    %161 = math.tanh %160 : vector<2x128xf32>
    %162 = arith.mulf %157, %161 : vector<2x128xf32>
    %163 = vector.broadcast %2 : vector<1x128xf32> to vector<2x128xf32>
    %164 = arith.mulf %162, %163 : vector<2x128xf32>
    %cst_48 = arith.constant dense<0.000000e+00> : vector<2xf32>
    %165 = vector.multi_reduction <add>, %164, %cst_48 [1] : vector<2x128xf32> to vector<2xf32>
    %166 = vector.shape_cast %165 : vector<2xf32> to vector<2x1xf32>
    %c3_49 = arith.constant 3 : index
    %c0_50 = arith.constant 0 : index
    %167 = vector.load %arg3[%c3_49, %c0_50] : memref<8x4xf32, #tpu.memory_space<vmem>>, vector<1x4xf32>
    %168 = vector.broadcast %166 : vector<2x1xf32> to vector<2x4xf32>
    %169 = vector.broadcast %167 : vector<1x4xf32> to vector<2x4xf32>
    %170 = arith.mulf %168, %169 : vector<2x4xf32>
    %171 = arith.addf %132, %170 : vector<2x4xf32>
    %c0_51 = arith.constant 0 : index
    %c4 = arith.constant 4 : index
    %c0_52 = arith.constant 0 : index
    %172 = vector.load %arg5[%c0_51, %c4, %c0_52] : memref<2x8x512xf32, #tpu.memory_space<vmem>>, vector<2x1x512xf32>
    %173 = vector.shape_cast %172 : vector<2x1x512xf32> to vector<2x512xf32>
    %174 = arith.truncf %162 : vector<2x128xf32> to vector<2x128xbf16>
    %cst_53 = arith.constant dense<0.000000e+00> : vector<2x512xf32>
    %175 = tpu.matmul %174, %11, %cst_53 {dimension_numbers = #tpu.dot_dimension_numbers<[1], [0], [0], [1], [0, 0, 1, 1], [], []>} : vector<2x128xbf16>, vector<128x512xbf16>, vector<2x512xf32> -> vector<2x512xf32>
    %176 = arith.addf %173, %175 : vector<2x512xf32>
    %177 = vector.extract_strided_slice %176 {offsets = [0, 0], sizes = [2, 128], strides = [1, 1]} : vector<2x512xf32> to vector<2x128xf32>
    %178 = arith.negf %177 : vector<2x128xf32>
    %179 = math.exp %178 : vector<2x128xf32>
    %cst_54 = arith.constant 1.000000e+00 : f32
    %180 = vector.broadcast %cst_54 : f32 to vector<2x128xf32>
    %181 = arith.addf %180, %179 : vector<2x128xf32>
    %182 = arith.divf %180, %181 : vector<2x128xf32>
    %183 = vector.extract_strided_slice %176 {offsets = [0, 128], sizes = [2, 128], strides = [1, 1]} : vector<2x512xf32> to vector<2x128xf32>
    %184 = arith.negf %183 : vector<2x128xf32>
    %185 = math.exp %184 : vector<2x128xf32>
    %cst_55 = arith.constant 1.000000e+00 : f32
    %186 = vector.broadcast %cst_55 : f32 to vector<2x128xf32>
    %187 = arith.addf %186, %185 : vector<2x128xf32>
    %188 = arith.divf %186, %187 : vector<2x128xf32>
    %189 = vector.extract_strided_slice %176 {offsets = [0, 256], sizes = [2, 128], strides = [1, 1]} : vector<2x512xf32> to vector<2x128xf32>
    %190 = math.tanh %189 : vector<2x128xf32>
    %191 = vector.extract_strided_slice %176 {offsets = [0, 384], sizes = [2, 128], strides = [1, 1]} : vector<2x512xf32> to vector<2x128xf32>
    %192 = arith.negf %191 : vector<2x128xf32>
    %193 = math.exp %192 : vector<2x128xf32>
    %cst_56 = arith.constant 1.000000e+00 : f32
    %194 = vector.broadcast %cst_56 : f32 to vector<2x128xf32>
    %195 = arith.addf %194, %193 : vector<2x128xf32>
    %196 = arith.divf %194, %195 : vector<2x128xf32>
    %197 = arith.mulf %188, %160 : vector<2x128xf32>
    %198 = arith.mulf %182, %190 : vector<2x128xf32>
    %199 = arith.addf %197, %198 : vector<2x128xf32>
    %200 = math.tanh %199 : vector<2x128xf32>
    %201 = arith.mulf %196, %200 : vector<2x128xf32>
    %202 = vector.broadcast %2 : vector<1x128xf32> to vector<2x128xf32>
    %203 = arith.mulf %201, %202 : vector<2x128xf32>
    %cst_57 = arith.constant dense<0.000000e+00> : vector<2xf32>
    %204 = vector.multi_reduction <add>, %203, %cst_57 [1] : vector<2x128xf32> to vector<2xf32>
    %205 = vector.shape_cast %204 : vector<2xf32> to vector<2x1xf32>
    %c4_58 = arith.constant 4 : index
    %c0_59 = arith.constant 0 : index
    %206 = vector.load %arg3[%c4_58, %c0_59] : memref<8x4xf32, #tpu.memory_space<vmem>>, vector<1x4xf32>
    %207 = vector.broadcast %205 : vector<2x1xf32> to vector<2x4xf32>
    %208 = vector.broadcast %206 : vector<1x4xf32> to vector<2x4xf32>
    %209 = arith.mulf %207, %208 : vector<2x4xf32>
    %210 = arith.addf %171, %209 : vector<2x4xf32>
    %c0_60 = arith.constant 0 : index
    %c5 = arith.constant 5 : index
    %c0_61 = arith.constant 0 : index
    %211 = vector.load %arg5[%c0_60, %c5, %c0_61] : memref<2x8x512xf32, #tpu.memory_space<vmem>>, vector<2x1x512xf32>
    %212 = vector.shape_cast %211 : vector<2x1x512xf32> to vector<2x512xf32>
    %213 = arith.truncf %201 : vector<2x128xf32> to vector<2x128xbf16>
    %cst_62 = arith.constant dense<0.000000e+00> : vector<2x512xf32>
    %214 = tpu.matmul %213, %11, %cst_62 {dimension_numbers = #tpu.dot_dimension_numbers<[1], [0], [0], [1], [0, 0, 1, 1], [], []>} : vector<2x128xbf16>, vector<128x512xbf16>, vector<2x512xf32> -> vector<2x512xf32>
    %215 = arith.addf %212, %214 : vector<2x512xf32>
    %216 = vector.extract_strided_slice %215 {offsets = [0, 0], sizes = [2, 128], strides = [1, 1]} : vector<2x512xf32> to vector<2x128xf32>
    %217 = arith.negf %216 : vector<2x128xf32>
    %218 = math.exp %217 : vector<2x128xf32>
    %cst_63 = arith.constant 1.000000e+00 : f32
    %219 = vector.broadcast %cst_63 : f32 to vector<2x128xf32>
    %220 = arith.addf %219, %218 : vector<2x128xf32>
    %221 = arith.divf %219, %220 : vector<2x128xf32>
    %222 = vector.extract_strided_slice %215 {offsets = [0, 128], sizes = [2, 128], strides = [1, 1]} : vector<2x512xf32> to vector<2x128xf32>
    %223 = arith.negf %222 : vector<2x128xf32>
    %224 = math.exp %223 : vector<2x128xf32>
    %cst_64 = arith.constant 1.000000e+00 : f32
    %225 = vector.broadcast %cst_64 : f32 to vector<2x128xf32>
    %226 = arith.addf %225, %224 : vector<2x128xf32>
    %227 = arith.divf %225, %226 : vector<2x128xf32>
    %228 = vector.extract_strided_slice %215 {offsets = [0, 256], sizes = [2, 128], strides = [1, 1]} : vector<2x512xf32> to vector<2x128xf32>
    %229 = math.tanh %228 : vector<2x128xf32>
    %230 = vector.extract_strided_slice %215 {offsets = [0, 384], sizes = [2, 128], strides = [1, 1]} : vector<2x512xf32> to vector<2x128xf32>
    %231 = arith.negf %230 : vector<2x128xf32>
    %232 = math.exp %231 : vector<2x128xf32>
    %cst_65 = arith.constant 1.000000e+00 : f32
    %233 = vector.broadcast %cst_65 : f32 to vector<2x128xf32>
    %234 = arith.addf %233, %232 : vector<2x128xf32>
    %235 = arith.divf %233, %234 : vector<2x128xf32>
    %236 = arith.mulf %227, %199 : vector<2x128xf32>
    %237 = arith.mulf %221, %229 : vector<2x128xf32>
    %238 = arith.addf %236, %237 : vector<2x128xf32>
    %239 = math.tanh %238 : vector<2x128xf32>
    %240 = arith.mulf %235, %239 : vector<2x128xf32>
    %241 = vector.broadcast %2 : vector<1x128xf32> to vector<2x128xf32>
    %242 = arith.mulf %240, %241 : vector<2x128xf32>
    %cst_66 = arith.constant dense<0.000000e+00> : vector<2xf32>
    %243 = vector.multi_reduction <add>, %242, %cst_66 [1] : vector<2x128xf32> to vector<2xf32>
    %244 = vector.shape_cast %243 : vector<2xf32> to vector<2x1xf32>
    %c5_67 = arith.constant 5 : index
    %c0_68 = arith.constant 0 : index
    %245 = vector.load %arg3[%c5_67, %c0_68] : memref<8x4xf32, #tpu.memory_space<vmem>>, vector<1x4xf32>
    %246 = vector.broadcast %244 : vector<2x1xf32> to vector<2x4xf32>
    %247 = vector.broadcast %245 : vector<1x4xf32> to vector<2x4xf32>
    %248 = arith.mulf %246, %247 : vector<2x4xf32>
    %249 = arith.addf %210, %248 : vector<2x4xf32>
    %c0_69 = arith.constant 0 : index
    %c6 = arith.constant 6 : index
    %c0_70 = arith.constant 0 : index
    %250 = vector.load %arg5[%c0_69, %c6, %c0_70] : memref<2x8x512xf32, #tpu.memory_space<vmem>>, vector<2x1x512xf32>
    %251 = vector.shape_cast %250 : vector<2x1x512xf32> to vector<2x512xf32>
    %252 = arith.truncf %240 : vector<2x128xf32> to vector<2x128xbf16>
    %cst_71 = arith.constant dense<0.000000e+00> : vector<2x512xf32>
    %253 = tpu.matmul %252, %11, %cst_71 {dimension_numbers = #tpu.dot_dimension_numbers<[1], [0], [0], [1], [0, 0, 1, 1], [], []>} : vector<2x128xbf16>, vector<128x512xbf16>, vector<2x512xf32> -> vector<2x512xf32>
    %254 = arith.addf %251, %253 : vector<2x512xf32>
    %255 = vector.extract_strided_slice %254 {offsets = [0, 0], sizes = [2, 128], strides = [1, 1]} : vector<2x512xf32> to vector<2x128xf32>
    %256 = arith.negf %255 : vector<2x128xf32>
    %257 = math.exp %256 : vector<2x128xf32>
    %cst_72 = arith.constant 1.000000e+00 : f32
    %258 = vector.broadcast %cst_72 : f32 to vector<2x128xf32>
    %259 = arith.addf %258, %257 : vector<2x128xf32>
    %260 = arith.divf %258, %259 : vector<2x128xf32>
    %261 = vector.extract_strided_slice %254 {offsets = [0, 128], sizes = [2, 128], strides = [1, 1]} : vector<2x512xf32> to vector<2x128xf32>
    %262 = arith.negf %261 : vector<2x128xf32>
    %263 = math.exp %262 : vector<2x128xf32>
    %cst_73 = arith.constant 1.000000e+00 : f32
    %264 = vector.broadcast %cst_73 : f32 to vector<2x128xf32>
    %265 = arith.addf %264, %263 : vector<2x128xf32>
    %266 = arith.divf %264, %265 : vector<2x128xf32>
    %267 = vector.extract_strided_slice %254 {offsets = [0, 256], sizes = [2, 128], strides = [1, 1]} : vector<2x512xf32> to vector<2x128xf32>
    %268 = math.tanh %267 : vector<2x128xf32>
    %269 = vector.extract_strided_slice %254 {offsets = [0, 384], sizes = [2, 128], strides = [1, 1]} : vector<2x512xf32> to vector<2x128xf32>
    %270 = arith.negf %269 : vector<2x128xf32>
    %271 = math.exp %270 : vector<2x128xf32>
    %cst_74 = arith.constant 1.000000e+00 : f32
    %272 = vector.broadcast %cst_74 : f32 to vector<2x128xf32>
    %273 = arith.addf %272, %271 : vector<2x128xf32>
    %274 = arith.divf %272, %273 : vector<2x128xf32>
    %275 = arith.mulf %266, %238 : vector<2x128xf32>
    %276 = arith.mulf %260, %268 : vector<2x128xf32>
    %277 = arith.addf %275, %276 : vector<2x128xf32>
    %278 = math.tanh %277 : vector<2x128xf32>
    %279 = arith.mulf %274, %278 : vector<2x128xf32>
    %280 = vector.broadcast %2 : vector<1x128xf32> to vector<2x128xf32>
    %281 = arith.mulf %279, %280 : vector<2x128xf32>
    %cst_75 = arith.constant dense<0.000000e+00> : vector<2xf32>
    %282 = vector.multi_reduction <add>, %281, %cst_75 [1] : vector<2x128xf32> to vector<2xf32>
    %283 = vector.shape_cast %282 : vector<2xf32> to vector<2x1xf32>
    %c6_76 = arith.constant 6 : index
    %c0_77 = arith.constant 0 : index
    %284 = vector.load %arg3[%c6_76, %c0_77] : memref<8x4xf32, #tpu.memory_space<vmem>>, vector<1x4xf32>
    %285 = vector.broadcast %283 : vector<2x1xf32> to vector<2x4xf32>
    %286 = vector.broadcast %284 : vector<1x4xf32> to vector<2x4xf32>
    %287 = arith.mulf %285, %286 : vector<2x4xf32>
    %288 = arith.addf %249, %287 : vector<2x4xf32>
    %c0_78 = arith.constant 0 : index
    %c7 = arith.constant 7 : index
    %c0_79 = arith.constant 0 : index
    %289 = vector.load %arg5[%c0_78, %c7, %c0_79] : memref<2x8x512xf32, #tpu.memory_space<vmem>>, vector<2x1x512xf32>
    %290 = vector.shape_cast %289 : vector<2x1x512xf32> to vector<2x512xf32>
    %291 = arith.truncf %279 : vector<2x128xf32> to vector<2x128xbf16>
    %cst_80 = arith.constant dense<0.000000e+00> : vector<2x512xf32>
    %292 = tpu.matmul %291, %11, %cst_80 {dimension_numbers = #tpu.dot_dimension_numbers<[1], [0], [0], [1], [0, 0, 1, 1], [], []>} : vector<2x128xbf16>, vector<128x512xbf16>, vector<2x512xf32> -> vector<2x512xf32>
    %293 = arith.addf %290, %292 : vector<2x512xf32>
    %294 = vector.extract_strided_slice %293 {offsets = [0, 0], sizes = [2, 128], strides = [1, 1]} : vector<2x512xf32> to vector<2x128xf32>
    %295 = arith.negf %294 : vector<2x128xf32>
    %296 = math.exp %295 : vector<2x128xf32>
    %cst_81 = arith.constant 1.000000e+00 : f32
    %297 = vector.broadcast %cst_81 : f32 to vector<2x128xf32>
    %298 = arith.addf %297, %296 : vector<2x128xf32>
    %299 = arith.divf %297, %298 : vector<2x128xf32>
    %300 = vector.extract_strided_slice %293 {offsets = [0, 128], sizes = [2, 128], strides = [1, 1]} : vector<2x512xf32> to vector<2x128xf32>
    %301 = arith.negf %300 : vector<2x128xf32>
    %302 = math.exp %301 : vector<2x128xf32>
    %cst_82 = arith.constant 1.000000e+00 : f32
    %303 = vector.broadcast %cst_82 : f32 to vector<2x128xf32>
    %304 = arith.addf %303, %302 : vector<2x128xf32>
    %305 = arith.divf %303, %304 : vector<2x128xf32>
    %306 = vector.extract_strided_slice %293 {offsets = [0, 256], sizes = [2, 128], strides = [1, 1]} : vector<2x512xf32> to vector<2x128xf32>
    %307 = math.tanh %306 : vector<2x128xf32>
    %308 = vector.extract_strided_slice %293 {offsets = [0, 384], sizes = [2, 128], strides = [1, 1]} : vector<2x512xf32> to vector<2x128xf32>
    %309 = arith.negf %308 : vector<2x128xf32>
    %310 = math.exp %309 : vector<2x128xf32>
    %cst_83 = arith.constant 1.000000e+00 : f32
    %311 = vector.broadcast %cst_83 : f32 to vector<2x128xf32>
    %312 = arith.addf %311, %310 : vector<2x128xf32>
    %313 = arith.divf %311, %312 : vector<2x128xf32>
    %314 = arith.mulf %305, %277 : vector<2x128xf32>
    %315 = arith.mulf %299, %307 : vector<2x128xf32>
    %316 = arith.addf %314, %315 : vector<2x128xf32>
    %317 = math.tanh %316 : vector<2x128xf32>
    %318 = arith.mulf %313, %317 : vector<2x128xf32>
    %319 = vector.broadcast %2 : vector<1x128xf32> to vector<2x128xf32>
    %320 = arith.mulf %318, %319 : vector<2x128xf32>
    %cst_84 = arith.constant dense<0.000000e+00> : vector<2xf32>
    %321 = vector.multi_reduction <add>, %320, %cst_84 [1] : vector<2x128xf32> to vector<2xf32>
    %322 = vector.shape_cast %321 : vector<2xf32> to vector<2x1xf32>
    %c7_85 = arith.constant 7 : index
    %c0_86 = arith.constant 0 : index
    %323 = vector.load %arg3[%c7_85, %c0_86] : memref<8x4xf32, #tpu.memory_space<vmem>>, vector<1x4xf32>
    %324 = vector.broadcast %322 : vector<2x1xf32> to vector<2x4xf32>
    %325 = vector.broadcast %323 : vector<1x4xf32> to vector<2x4xf32>
    %326 = arith.mulf %324, %325 : vector<2x4xf32>
    %327 = arith.addf %288, %326 : vector<2x4xf32>
    %c0_87 = arith.constant 0 : index
    %c0_88 = arith.constant 0 : index
    %328 = vector.load %arg4[%c0_87, %c0_88] : memref<2x4xf32, #tpu.memory_space<vmem>>, vector<2x4xf32>
    tpu.vector_store %arg4[%c0_87, %c0_88], %327 {strides = array<i32>} : memref<2x4xf32, #tpu.memory_space<vmem>>, vector<2x4xf32>,
    return
  }
}

</mosaic_0001>

<llo_original>
// kernel: model_forward.1
$region0: #{model_forward.1}
  #allocation0 [shape = 'u32[]', space=smem, size = 0x4, offset = 0x4, fixed_abs, tag = 'smem constant byte address 0x4 - core index']
  #allocation1 [shape = 'u32[144,128]{1,0:T(1,128)}', space=vmem, size = 0x12000, scoped, tag = 'internal scratch']
  #allocation2 [shape = 'f32[2,8,512]{2,1,0:T(8,128)}', space=vmem, size = 0x8000, scoped, tag = 'scratch operand']
  %s0 = inlined_call_operand.hbm [shape: f32[2,8,16], index: 0, kind: input, shape index: {}]
  %s1 = inlined_call_operand.hbm [shape: f32[24,512], index: 1, kind: input, shape index: {}]
  %s2 = inlined_call_operand.hbm [shape: bf16[128,512], index: 2, kind: input, shape index: {}]
  %s3 = inlined_call_operand.vmem [shape: f32[8,4], index: 3, kind: input, shape index: {}]
  %s4 = inlined_call_operand.hbm [shape: f32[2,4], index: 4, kind: output, shape index: {}]
  %s5 = sld [smem:[#allocation0]]
  $region38: #{model_forward.1} parent=0
    _
  %s7 = ssub.s32 1, %s5
  %s8 = scalar_select 0, %s7, %s5
  $region1: #{model_forward.1} parent=0
    #allocation3 [shape = 'u8[8192]{0}', space=vmem, size = 0x2000, scoped, tag = 'input window, operand 0, single buffered']
    #allocation4 [shape = 's32[1]{0}', space=sflag, size = 0x4, scoped, tag = 'scoped memory for model_forward.1']
    #allocation5 [shape = 's32[1]{0}', space=sflag, size = 0x4, scoped, tag = 'scoped memory for model_forward.1']
    #allocation6 [shape = 'u8[49152]{0}', space=vmem, size = 0xc000, scoped, tag = 'input window, operand 1, single buffered']
    #allocation7 [shape = 's32[1]{0}', space=sflag, size = 0x4, scoped, tag = 'scoped memory for model_forward.1']
    #allocation8 [shape = 'u8[131072]{0}', space=vmem, size = 0x20000, scoped, tag = 'input window, operand 2, single buffered']
    #allocation9 [shape = 'u8[1024]{0}', space=vmem, size = 0x400, scoped, tag = 'output window, operand 0, single buffered']
    %9 = vsyncpa [#allocation4], 0
    %10 = vsyncpa [#allocation7], 0
    %11 = vsyncpa [#allocation5], 0
    // Predicated region
    $region2: #{model_forward.1} parent=1 // pred_check
      _
    $region3: #{model_forward.1} parent=1 // pred_check_branch
      %13 = sbr.rel (0) target = $region5
    $region4: #{model_forward.1} parent=1 // pred_region
      %s15 = ssub.s32 256, 256
      %16 = vsyncadd [#allocation4], %s15
      %s17 = sshll.u32 [#allocation3], 4
      %s18 = int_to_ptr.vmem [resolvable:$true] %s17
      %23 = dma.hbm_to_vmem [thread:$0]  %s0, 256, %s18, [#allocation4], 128, 128, 8
    $region5: #{model_forward.1} parent=1 // pred_fallthru
      _
    // Predicated region
    $region6: #{model_forward.1} parent=1 // pred_check
      _
    $region7: #{model_forward.1} parent=1 // pred_check_branch
      %25 = sbr.rel (0) target = $region9
    $region8: #{model_forward.1} parent=1 // pred_region
      %s27 = ssub.s32 1536, 1536
      %28 = vsyncadd [#allocation7], %s27
      %s29 = sshll.u32 [#allocation6], 4
      %s30 = int_to_ptr.vmem [resolvable:$true] %s29
      %35 = dma.hbm_to_vmem [thread:$0]  %s1, 1536, %s30, [#allocation7], 512, 512, 32
    $region9: #{model_forward.1} parent=1 // pred_fallthru
      _
    // Predicated region
    $region10: #{model_forward.1} parent=1 // pred_check
      _
    $region11: #{model_forward.1} parent=1 // pred_check_branch
      %37 = sbr.rel (0) target = $region13
    $region12: #{model_forward.1} parent=1 // pred_region
      %s39 = ssub.s32 4096, 4096
      %40 = vsyncadd [#allocation7], %s39
      %s41 = sshll.u32 [#allocation8], 4
      %s42 = int_to_ptr.vmem [resolvable:$true] %s41
      %47 = dma.hbm_to_vmem [thread:$0]  %s2, 4096, %s42, [#allocation7], 256, 256, 16
    $region13: #{model_forward.1} parent=1 // pred_fallthru
      _
    // Predicated region
    $region14: #{model_forward.1} parent=1 // pred_check
      _
    $region15: #{model_forward.1} parent=1 // pred_check_branch
      %49 = sbr.rel (0) target = $region17
    $region16: #{model_forward.1} parent=1 // pred_region
      _
    $region17: #{model_forward.1} parent=1 // pred_fallthru
      _
    // Predicated region
    $region18: #{model_forward.1} parent=1 // pred_check
      _
    $region19: #{model_forward.1} parent=1 // pred_check_branch
      %51 = sbr.rel (0) target = $region21
    $region20: #{model_forward.1} parent=1 // pred_region
      %52 = dma.done [#allocation4], 256
    $region21: #{model_forward.1} parent=1 // pred_fallthru
      _
    // Predicated region
    $region22: #{model_forward.1} parent=1 // pred_check
      _
    $region23: #{model_forward.1} parent=1 // pred_check_branch
      %54 = sbr.rel (0) target = $region25
    $region24: #{model_forward.1} parent=1 // pred_region
      %55 = dma.done [#allocation7], 1536
    $region25: #{model_forward.1} parent=1 // pred_fallthru
      _
    // Predicated region
    $region26: #{model_forward.1} parent=1 // pred_check
      _
    $region27: #{model_forward.1} parent=1 // pred_check_branch
      %57 = sbr.rel (0) target = $region29
    $region28: #{model_forward.1} parent=1 // pred_region
      %58 = dma.done [#allocation7], 4096
    $region29: #{model_forward.1} parent=1 // pred_fallthru
      _
    %v60 = vld [vmem:[#allocation6] sm:$0xff]
    %v61 = vld [vmem:[#allocation6 + $0x8] sm:$0xff]
    %v62 = vld [vmem:[#allocation6 + $0x10] sm:$0xff]
    %v63 = vld [vmem:[#allocation6 + $0x18] sm:$0xff]
    %v64 = vld [vmem:[#allocation6 + $0x20] sm:$0xff]
    %v65 = vld [vmem:[#allocation6 + $0x28] sm:$0xff]
    %v66 = vld [vmem:[#allocation6 + $0x30] sm:$0xff]
    %v67 = vld [vmem:[#allocation6 + $0x38] sm:$0xff]
    %s68 = scalar_lea.vmem [#allocation6], 64
    %v69 = vld [vmem:[%s68] ss:$8 sm:$0xf]
    %v70 = vld [vmem:[#allocation6 + $0x41] ss:$0 sm:$0xff]
    %v71 = vld [vmem:[#allocation6 + $0x42] ss:$0 sm:$0xff]
    %v72 = vld [vmem:[#allocation3] sm:$0xff]
    %v73 = vld [vmem:[#allocation3 + $0x8] sm:$0xff]
    %v75 = vlaneseq
    %v76 = vshrl.u32 %v75, 7
    %v77 = vsub.s32 0, %v76
    %v78 = vrot.slane %v69, %v77
    %v79 = vlaneseq
    %v80 = vshrl.u32 %v79, 7
    %v81 = vsub.s32 1, %v80
    %v82 = vrot.slane %v69, %v81
    %v83 = vlaneseq
    %v84 = vshrl.u32 %v83, 7
    %v85 = vsub.s32 2, %v84
    %v86 = vrot.slane %v69, %v85
    %v87 = vlaneseq
    %v88 = vshrl.u32 %v87, 7
    %v89 = vsub.s32 3, %v88
    %v90 = vrot.slane %v69, %v89
    %vm95 = vcmask 130048
    %v97 = vsel %vm95, %v72, 0
    %v100 = vsel %vm95, %v73, 0
    %102 = vmatprep.subr.mxu0 0.0
    %103 = vmatpush1.msra.mxu0 0.0
    %104 = vmatprep.subr.mxu0 0.0
    %105 = vmatpush1.msra.mxu0 0.0
    %106 = vmatprep.subr.mxu0 0.0
    %107 = vmatpush1.msra.mxu0 0.0
    %108 = vmatprep.subr.mxu0 0.0
    %109 = vmatpush1.msra.mxu0 0.0
    %110 = vmatprep.subr.mxu0 0.0
    %111 = vmatpush1.msra.mxu0 0.0
    %112 = vmatprep.subr.mxu0 0.0
    %113 = vmatpush1.msra.mxu0 0.0
    %114 = vmatprep.subr.mxu0 0.0
    %115 = vmatpush1.msra.mxu0 0.0
    %116 = vmatprep.subr.mxu0 0.0
    %117 = vmatpush1.msra.mxu0 0.0
    %118 = vmatprep.subr.mxu0 0.0
    %119 = vmatpush1.msra.mxu0 0.0
    %120 = vmatprep.subr.mxu0 0.0
    %121 = vmatpush1.msra.mxu0 0.0
    %122 = vmatprep.subr.mxu0 0.0
    %123 = vmatpush1.msra.mxu0 0.0
    %124 = vmatprep.subr.mxu0 0.0
    %125 = vmatpush1.msra.mxu0 0.0
    %126 = vmatprep.subr.mxu0 0.0
    %127 = vmatpush1.msra.mxu0 0.0
    %128 = vmatprep.subr.mxu0 0.0
    %129 = vmatpush1.msra.mxu0 0.0
    %130 = vmatprep.subr.mxu0 %v65
    %131 = vmatpush1.msra.mxu0 %v64
    %132 = vmatprep.subr.mxu0 %v61
    %133 = vmatpush1.msra.mxu0 %v60
    %134 = vmatprep.subr.mxu0 0.0
    %135 = vmatpush2.msra.mxu0 0.0
    %136 = vmatprep.subr.mxu0 0.0
    %137 = vmatpush2.msra.mxu0 0.0
    %138 = vmatprep.subr.mxu0 0.0
    %139 = vmatpush2.msra.mxu0 0.0
    %140 = vmatprep.subr.mxu0 0.0
    %141 = vmatpush2.msra.mxu0 0.0
    %142 = vmatprep.subr.mxu0 0.0
    %143 = vmatpush2.msra.mxu0 0.0
    %144 = vmatprep.subr.mxu0 0.0
    %145 = vmatpush2.msra.mxu0 0.0
    %146 = vmatprep.subr.mxu0 0.0
    %147 = vmatpush2.msra.mxu0 0.0
    %148 = vmatprep.subr.mxu0 0.0
    %149 = vmatpush2.msra.mxu0 0.0
    %150 = vmatprep.subr.mxu0 0.0
    %151 = vmatpush2.msra.mxu0 0.0
    %152 = vmatprep.subr.mxu0 0.0
    %153 = vmatpush2.msra.mxu0 0.0
    %154 = vmatprep.subr.mxu0 0.0
    %155 = vmatpush2.msra.mxu0 0.0
    %156 = vmatprep.subr.mxu0 0.0
    %157 = vmatpush2.msra.mxu0 0.0
    %158 = vmatprep.subr.mxu0 0.0
    %159 = vmatpush2.msra.mxu0 0.0
    %160 = vmatprep.subr.mxu0 0.0
    %161 = vmatpush2.msra.mxu0 0.0
    %162 = vmatprep.subr.mxu0 0.0
    %163 = vmatpush2.msra.mxu0 0.0
    %164 = vmatprep.subr.mxu0 0.0
    %165 = vmatpush2.msra.mxu0 0.0
    %166 = vmatprep.mubr.f32.mxu0 0.0
    %167 = vmatmul.mubr.f32.gmra.mxu0 %v97
    %v168 = vpop.f32.mrf.mxu0
    %v169 = vadd.f32 %v78, %v168
    %v170 = vpop.f32.mrf.mxu0
    %v171 = vadd.f32 %v82, %v170
    %172 = vmatprep.mubr.f32.mxu0 0.0
    %173 = vmatmul.mubr.f32.gmra.mxu0 %v100
    %v174 = vpop.f32.mrf.mxu0
    %v175 = vadd.f32 %v78, %v174
    %v176 = vpop.f32.mrf.mxu0
    %v177 = vadd.f32 %v82, %v176
    %178 = vdwg.mxu0
    %179 = vmatprep.subr.mxu0 0.0
    %180 = vmatpush1.msra.mxu0 0.0
    %181 = vmatprep.subr.mxu0 0.0
    %182 = vmatpush1.msra.mxu0 0.0
    %183 = vmatprep.subr.mxu0 0.0
    %184 = vmatpush1.msra.mxu0 0.0
    %185 = vmatprep.subr.mxu0 0.0
    %186 = vmatpush1.msra.mxu0 0.0
    %187 = vmatprep.subr.mxu0 0.0
    %188 = vmatpush1.msra.mxu0 0.0
    %189 = vmatprep.subr.mxu0 0.0
    %190 = vmatpush1.msra.mxu0 0.0
    %191 = vmatprep.subr.mxu0 0.0
    %192 = vmatpush1.msra.mxu0 0.0
    %193 = vmatprep.subr.mxu0 0.0
    %194 = vmatpush1.msra.mxu0 0.0
    %195 = vmatprep.subr.mxu0 0.0
    %196 = vmatpush1.msra.mxu0 0.0
    %197 = vmatprep.subr.mxu0 0.0
    %198 = vmatpush1.msra.mxu0 0.0
    %199 = vmatprep.subr.mxu0 0.0
    %200 = vmatpush1.msra.mxu0 0.0
    %201 = vmatprep.subr.mxu0 0.0
    %202 = vmatpush1.msra.mxu0 0.0
    %203 = vmatprep.subr.mxu0 0.0
    %204 = vmatpush1.msra.mxu0 0.0
    %205 = vmatprep.subr.mxu0 0.0
    %206 = vmatpush1.msra.mxu0 0.0
    %207 = vmatprep.subr.mxu0 %v67
    %208 = vmatpush1.msra.mxu0 %v66
    %209 = vmatprep.subr.mxu0 %v63
    %210 = vmatpush1.msra.mxu0 %v62
    %211 = vmatprep.subr.mxu0 0.0
    %212 = vmatpush2.msra.mxu0 0.0
    %213 = vmatprep.subr.mxu0 0.0
    %214 = vmatpush2.msra.mxu0 0.0
    %215 = vmatprep.subr.mxu0 0.0
    %216 = vmatpush2.msra.mxu0 0.0
    %217 = vmatprep.subr.mxu0 0.0
    %218 = vmatpush2.msra.mxu0 0.0
    %219 = vmatprep.subr.mxu0 0.0
    %220 = vmatpush2.msra.mxu0 0.0
    %221 = vmatprep.subr.mxu0 0.0
    %222 = vmatpush2.msra.mxu0 0.0
    %223 = vmatprep.subr.mxu0 0.0
    %224 = vmatpush2.msra.mxu0 0.0
    %225 = vmatprep.subr.mxu0 0.0
    %226 = vmatpush2.msra.mxu0 0.0
    %227 = vmatprep.subr.mxu0 0.0
    %228 = vmatpush2.msra.mxu0 0.0
    %229 = vmatprep.subr.mxu0 0.0
    %230 = vmatpush2.msra.mxu0 0.0
    %231 = vmatprep.subr.mxu0 0.0
    %232 = vmatpush2.msra.mxu0 0.0
    %233 = vmatprep.subr.mxu0 0.0
    %234 = vmatpush2.msra.mxu0 0.0
    %235 = vmatprep.subr.mxu0 0.0
    %236 = vmatpush2.msra.mxu0 0.0
    %237 = vmatprep.subr.mxu0 0.0
    %238 = vmatpush2.msra.mxu0 0.0
    %239 = vmatprep.subr.mxu0 0.0
    %240 = vmatpush2.msra.mxu0 0.0
    %241 = vmatprep.subr.mxu0 0.0
    %242 = vmatpush2.msra.mxu0 0.0
    %243 = vmatprep.mubr.f32.mxu0 0.0
    %244 = vmatmul.mubr.f32.gmra.mxu0 %v97
    %v245 = vpop.f32.mrf.mxu0
    %v246 = vadd.f32 %v86, %v245
    %v247 = vpop.f32.mrf.mxu0
    %v248 = vadd.f32 %v90, %v247
    %249 = vmatprep.mubr.f32.mxu0 0.0
    %250 = vmatmul.mubr.f32.gmra.mxu0 %v100
    %v251 = vpop.f32.mrf.mxu0
    %v252 = vadd.f32 %v86, %v251
    %v253 = vpop.f32.mrf.mxu0
    %v254 = vadd.f32 %v90, %v253
    %255 = vdwg.mxu0
    %256 = vst [vmem:[#allocation2] sm:$0xff] %v169
    %257 = vst [vmem:[#allocation2 + $0x8] sm:$0xff] %v171
    %258 = vst [vmem:[#allocation2 + $0x10] sm:$0xff] %v246
    %259 = vst [vmem:[#allocation2 + $0x18] sm:$0xff] %v248
    %260 = vst [vmem:[#allocation2 + $0x20] sm:$0xff] %v175
    %261 = vst [vmem:[#allocation2 + $0x28] sm:$0xff] %v177
    %262 = vst [vmem:[#allocation2 + $0x30] sm:$0xff] %v252
    %263 = vst [vmem:[#allocation2 + $0x38] sm:$0xff] %v254
    %v264 = vld [vmem:[#allocation8] sm:$0xff]
    %v265 = vld [vmem:[#allocation8 + $0x8] sm:$0xff]
    %v266 = vld [vmem:[#allocation8 + $0x10] sm:$0xff]
    %v267 = vld [vmem:[#allocation8 + $0x18] sm:$0xff]
    %v268 = vld [vmem:[#allocation8 + $0x20] sm:$0xff]
    %v269 = vld [vmem:[#allocation8 + $0x28] sm:$0xff]
    %v270 = vld [vmem:[#allocation8 + $0x30] sm:$0xff]
    %v271 = vld [vmem:[#allocation8 + $0x38] sm:$0xff]
    %v272 = vld [vmem:[#allocation8 + $0x40] sm:$0xff]
    %v273 = vld [vmem:[#allocation8 + $0x48] sm:$0xff]
    %v274 = vld [vmem:[#allocation8 + $0x50] sm:$0xff]
    %v275 = vld [vmem:[#allocation8 + $0x58] sm:$0xff]
    %v276 = vld [vmem:[#allocation8 + $0x60] sm:$0xff]
    %v277 = vld [vmem:[#allocation8 + $0x68] sm:$0xff]
    %v278 = vld [vmem:[#allocation8 + $0x70] sm:$0xff]
    %v279 = vld [vmem:[#allocation8 + $0x78] sm:$0xff]
    %v280 = vld [vmem:[#allocation8 + $0x80] sm:$0xff]
    %v281 = vld [vmem:[#allocation8 + $0x88] sm:$0xff]
    %v282 = vld [vmem:[#allocation8 + $0x90] sm:$0xff]
    %v283 = vld [vmem:[#allocation8 + $0x98] sm:$0xff]
    %v284 = vld [vmem:[#allocation8 + $0xa0] sm:$0xff]
    %v285 = vld [vmem:[#allocation8 + $0xa8] sm:$0xff]
    %v286 = vld [vmem:[#allocation8 + $0xb0] sm:$0xff]
    %v287 = vld [vmem:[#allocation8 + $0xb8] sm:$0xff]
    %v288 = vld [vmem:[#allocation8 + $0xc0] sm:$0xff]
    %v289 = vld [vmem:[#allocation8 + $0xc8] sm:$0xff]
    %v290 = vld [vmem:[#allocation8 + $0xd0] sm:$0xff]
    %v291 = vld [vmem:[#allocation8 + $0xd8] sm:$0xff]
    %v292 = vld [vmem:[#allocation8 + $0xe0] sm:$0xff]
    %v293 = vld [vmem:[#allocation8 + $0xe8] sm:$0xff]
    %v294 = vld [vmem:[#allocation8 + $0xf0] sm:$0xff]
    %v295 = vld [vmem:[#allocation8 + $0xf8] sm:$0xff]
    %v296 = vld [vmem:[#allocation2] ss:$8 sm:$0xf]
    %s297 = scalar_lea.vmem [#allocation2], 32
    %v298 = vld [vmem:[%s297] ss:$8 sm:$0xf]
    %v331 = vunpack.c.l.b16 %v264
    %v332 = vunpack.c.h.b16 %v264
    %v333 = vunpack.c.l.b16 %v265
    %v334 = vunpack.c.h.b16 %v265
    %v335 = vunpack.c.l.b16 %v266
    %v336 = vunpack.c.h.b16 %v266
    %v337 = vunpack.c.l.b16 %v267
    %v338 = vunpack.c.h.b16 %v267
    %v339 = vunpack.c.l.b16 %v268
    %v340 = vunpack.c.h.b16 %v268
    %v341 = vunpack.c.l.b16 %v269
    %v342 = vunpack.c.h.b16 %v269
    %v343 = vunpack.c.l.b16 %v270
    %v344 = vunpack.c.h.b16 %v270
    %v345 = vunpack.c.l.b16 %v271
    %v346 = vunpack.c.h.b16 %v271
    %v347 = vunpack.c.l.b16 %v272
    %v348 = vunpack.c.h.b16 %v272
    %v349 = vunpack.c.l.b16 %v273
    %v350 = vunpack.c.h.b16 %v273
    %v351 = vunpack.c.l.b16 %v274
    %v352 = vunpack.c.h.b16 %v274
    %v353 = vunpack.c.l.b16 %v275
    %v354 = vunpack.c.h.b16 %v275
    %v355 = vunpack.c.l.b16 %v276
    %v356 = vunpack.c.h.b16 %v276
    %v357 = vunpack.c.l.b16 %v277
    %v358 = vunpack.c.h.b16 %v277
    %v359 = vunpack.c.l.b16 %v278
    %v360 = vunpack.c.h.b16 %v278
    %v361 = vunpack.c.l.b16 %v279
    %v362 = vunpack.c.h.b16 %v279
    %v363 = vunpack.c.l.b16 %v280
    %v364 = vunpack.c.h.b16 %v280
    %v365 = vunpack.c.l.b16 %v281
    %v366 = vunpack.c.h.b16 %v281
    %v367 = vunpack.c.l.b16 %v282
    %v368 = vunpack.c.h.b16 %v282
    %v369 = vunpack.c.l.b16 %v283
    %v370 = vunpack.c.h.b16 %v283
    %v371 = vunpack.c.l.b16 %v284
    %v372 = vunpack.c.h.b16 %v284
    %v373 = vunpack.c.l.b16 %v285
    %v374 = vunpack.c.h.b16 %v285
    %v375 = vunpack.c.l.b16 %v286
    %v376 = vunpack.c.h.b16 %v286
    %v377 = vunpack.c.l.b16 %v287
    %v378 = vunpack.c.h.b16 %v287
    %v379 = vunpack.c.l.b16 %v288
    %v380 = vunpack.c.h.b16 %v288
    %v381 = vunpack.c.l.b16 %v289
    %v382 = vunpack.c.h.b16 %v289
    %v383 = vunpack.c.l.b16 %v290
    %v384 = vunpack.c.h.b16 %v290
    %v385 = vunpack.c.l.b16 %v291
    %v386 = vunpack.c.h.b16 %v291
    %v387 = vunpack.c.l.b16 %v292
    %v388 = vunpack.c.h.b16 %v292
    %v389 = vunpack.c.l.b16 %v293
    %v390 = vunpack.c.h.b16 %v293
    %v391 = vunpack.c.l.b16 %v294
    %v392 = vunpack.c.h.b16 %v294
    %v393 = vunpack.c.l.b16 %v295
    %v394 = vunpack.c.h.b16 %v295
    %v395 = vpack.c.b16 %v335, %v331
    %v396 = vpack.c.b16 %v336, %v332
    %v397 = vpack.c.b16 %v337, %v333
    %v398 = vpack.c.b16 %v338, %v334
    %v399 = vpack.c.b16 %v343, %v339
    %v400 = vpack.c.b16 %v344, %v340
    %v401 = vpack.c.b16 %v345, %v341
    %v402 = vpack.c.b16 %v346, %v342
    %v403 = vpack.c.b16 %v351, %v347
    %v404 = vpack.c.b16 %v352, %v348
    %v405 = vpack.c.b16 %v353, %v349
    %v406 = vpack.c.b16 %v354, %v350
    %v407 = vpack.c.b16 %v359, %v355
    %v408 = vpack.c.b16 %v360, %v356
    %v409 = vpack.c.b16 %v361, %v357
    %v410 = vpack.c.b16 %v362, %v358
    %v411 = vpack.c.b16 %v367, %v363
    %v412 = vpack.c.b16 %v368, %v364
    %v413 = vpack.c.b16 %v369, %v365
    %v414 = vpack.c.b16 %v370, %v366
    %v415 = vpack.c.b16 %v375, %v371
    %v416 = vpack.c.b16 %v376, %v372
    %v417 = vpack.c.b16 %v377, %v373
    %v418 = vpack.c.b16 %v378, %v374
    %v419 = vpack.c.b16 %v383, %v379
    %v420 = vpack.c.b16 %v384, %v380
    %v421 = vpack.c.b16 %v385, %v381
    %v422 = vpack.c.b16 %v386, %v382
    %v423 = vpack.c.b16 %v391, %v387
    %v424 = vpack.c.b16 %v392, %v388
    %v425 = vpack.c.b16 %v393, %v389
    %v426 = vpack.c.b16 %v394, %v390
    %459 = vmatprep.subr.bf16.mxu0 %v424
    %460 = vmatpush1.bf16.msra.mxu0 %v423
    %461 = vmatprep.subr.bf16.mxu0 %v420
    %462 = vmatpush1.bf16.msra.mxu0 %v419
    %463 = vmatprep.subr.bf16.mxu0 %v416
    %464 = vmatpush1.bf16.msra.mxu0 %v415
    %465 = vmatprep.subr.bf16.mxu0 %v412
    %466 = vmatpush1.bf16.msra.mxu0 %v411
    %467 = vmatprep.subr.bf16.mxu0 %v408
    %468 = vmatpush1.bf16.msra.mxu0 %v407
    %469 = vmatprep.subr.bf16.mxu0 %v404
    %470 = vmatpush1.bf16.msra.mxu0 %v403
    %471 = vmatprep.subr.bf16.mxu0 %v400
    %472 = vmatpush1.bf16.msra.mxu0 %v399
    %473 = vmatprep.subr.bf16.mxu0 %v396
    %474 = vmatpush1.bf16.msra.mxu0 %v395
    %475 = vmatprep.subr.bf16.mxu0 0
    %476 = vmatpush2.bf16.msra.mxu0 0
    %477 = vmatprep.subr.bf16.mxu0 0
    %478 = vmatpush2.bf16.msra.mxu0 0
    %479 = vmatprep.subr.bf16.mxu0 0
    %480 = vmatpush2.bf16.msra.mxu0 0
    %481 = vmatprep.subr.bf16.mxu0 0
    %482 = vmatpush2.bf16.msra.mxu0 0
    %483 = vmatprep.subr.bf16.mxu0 0
    %484 = vmatpush2.bf16.msra.mxu0 0
    %485 = vmatprep.subr.bf16.mxu0 0
    %486 = vmatpush2.bf16.msra.mxu0 0
    %487 = vmatprep.subr.bf16.mxu0 0
    %488 = vmatpush2.bf16.msra.mxu0 0
    %489 = vmatprep.subr.bf16.mxu0 0
    %490 = vmatpush2.bf16.msra.mxu0 0
    %491 = vmatprep.mubr.bf16.mxu0 0
    %492 = vmatmul.mubr.bf16.gmra.mxu0 0
    %v493 = vpop.f32.mrf.mxu0
    %v494 = vadd.f32 0.0, %v493
    %v495 = vpop.f32.mrf.mxu0
    %v496 = vadd.f32 0.0, %v495
    %v497 = vpop.f32.mrf.mxu0
    %v498 = vpop.f32.mrf.mxu0
    %499 = vdwg.mxu0
    %500 = vmatprep.subr.bf16.mxu0 %v426
    %501 = vmatpush1.bf16.msra.mxu0 %v425
    %502 = vmatprep.subr.bf16.mxu0 %v422
    %503 = vmatpush1.bf16.msra.mxu0 %v421
    %504 = vmatprep.subr.bf16.mxu0 %v418
    %505 = vmatpush1.bf16.msra.mxu0 %v417
    %506 = vmatprep.subr.bf16.mxu0 %v414
    %507 = vmatpush1.bf16.msra.mxu0 %v413
    %508 = vmatprep.subr.bf16.mxu0 %v410
    %509 = vmatpush1.bf16.msra.mxu0 %v409
    %510 = vmatprep.subr.bf16.mxu0 %v406
    %511 = vmatpush1.bf16.msra.mxu0 %v405
    %512 = vmatprep.subr.bf16.mxu0 %v402
    %513 = vmatpush1.bf16.msra.mxu0 %v401
    %514 = vmatprep.subr.bf16.mxu0 %v398
    %515 = vmatpush1.bf16.msra.mxu0 %v397
    %516 = vmatprep.subr.bf16.mxu0 0
    %517 = vmatpush2.bf16.msra.mxu0 0
    %518 = vmatprep.subr.bf16.mxu0 0
    %519 = vmatpush2.bf16.msra.mxu0 0
    %520 = vmatprep.subr.bf16.mxu0 0
    %521 = vmatpush2.bf16.msra.mxu0 0
    %522 = vmatprep.subr.bf16.mxu0 0
    %523 = vmatpush2.bf16.msra.mxu0 0
    %524 = vmatprep.subr.bf16.mxu0 0
    %525 = vmatpush2.bf16.msra.mxu0 0
    %526 = vmatprep.subr.bf16.mxu0 0
    %527 = vmatpush2.bf16.msra.mxu0 0
    %528 = vmatprep.subr.bf16.mxu0 0
    %529 = vmatpush2.bf16.msra.mxu0 0
    %530 = vmatprep.subr.bf16.mxu0 0
    %531 = vmatpush2.bf16.msra.mxu0 0
    %532 = vmatprep.mubr.bf16.mxu0 0
    %533 = vmatmul.mubr.bf16.gmra.mxu0 0
    %v534 = vpop.f32.mrf.mxu0
    %v535 = vadd.f32 0.0, %v534
    %v536 = vpop.f32.mrf.mxu0
    %v537 = vadd.f32 0.0, %v536
    %v538 = vpop.f32.mrf.mxu0
    %v539 = vpop.f32.mrf.mxu0
    %540 = vdwg.mxu0
    %v545 = vcombine.low %v494, %v496
    %v546 = vcombine.low %v535, %v537
    %v548 = vunpack.c.l.s4 1966171168
    %v549 = vunpack.c.0.s8 %v548
    %v550 = vlaneseq
    %v551 = vshrl.u32 %v550, 7
    %v552 = vsub.s32 %v549, %v551
    %v553 = vrot.slane %v545, %v552
    %v555 = vunpack.c.l.s4 1966171168
    %v556 = vunpack.c.0.s8 %v555
    %v557 = vlaneseq
    %v558 = vshrl.u32 %v557, 7
    %v559 = vsub.s32 %v556, %v558
    %v560 = vrot.slane %v546, %v559
    %v561 = vcombine.low %v553, %v560
    %v562 = vcombine.high %v553, %v560
    %v564 = vunpack.c.l.s4 1966171168
    %v565 = vunpack.c.0.s8 %v564
    %v566 = vlaneseq
    %v567 = vshrl.u32 %v566, 7
    %v568 = vsub.s32 %v565, %v567
    %v569 = vrot.slane %v561, %v568
    %v571 = vunpack.c.l.s4 1966171168
    %v572 = vunpack.c.0.s8 %v571
    %v573 = vlaneseq
    %v574 = vshrl.u32 %v573, 7
    %v575 = vsub.s32 %v572, %v574
    %v576 = vrot.slane %v562, %v575
    %v579 = vadd.f32 %v296, %v569
    %v580 = vadd.f32 %v298, %v576
    %v581 = vxor.u32 %v579, 2147483648
    %v582 = vxor.u32 %v580, 2147483648
    %v583 = vmul.f32 %v581, 1.442695
    %v584 = vpow.pop %v583
    %v585 = vmul.f32 %v582, 1.442695
    %v586 = vpow.pop %v585
    %v587 = vadd.f32 %v584, 1.0
    %v588 = vadd.f32 %v586, 1.0
    %v589 = vrcp.pop %v587
    %v590 = vmul.f32 1.0, %v589
    %v591 = vrcp.pop %v588
    %v592 = vmul.f32 1.0, %v591
    %v595 = vrot.slane %v579, 1
    %v596 = vrot.slane %v580, 1
    %v599 = vxor.u32 %v595, 2147483648
    %v600 = vxor.u32 %v596, 2147483648
    %v601 = vmul.f32 %v599, 1.442695
    %v602 = vpow.pop %v601
    %v603 = vmul.f32 %v600, 1.442695
    %v604 = vpow.pop %v603
    %v605 = vadd.f32 %v602, 1.0
    %v606 = vadd.f32 %v604, 1.0
    %v607 = vrcp.pop %v605
    %v608 = vmul.f32 1.0, %v607
    %v609 = vrcp.pop %v606
    %v610 = vmul.f32 1.0, %v609
    %v611 = vrot.slane %v579, 2
    %v612 = vrot.slane %v580, 2
    %v615 = vtanh.pop %v611
    %v616 = vtanh.pop %v612
    %v617 = vrot.slane %v579, 3
    %v618 = vrot.slane %v580, 3
    %v621 = vxor.u32 %v617, 2147483648
    %v622 = vxor.u32 %v618, 2147483648
    %v623 = vmul.f32 %v621, 1.442695
    %v624 = vpow.pop %v623
    %v625 = vmul.f32 %v622, 1.442695
    %v626 = vpow.pop %v625
    %v627 = vadd.f32 %v624, 1.0
    %v628 = vadd.f32 %v626, 1.0
    %v629 = vrcp.pop %v627
    %v630 = vmul.f32 1.0, %v629
    %v631 = vrcp.pop %v628
    %v632 = vmul.f32 1.0, %v631
    %v633 = vmul.f32 %v608, 0.0
    %v634 = vmul.f32 %v610, 0.0
    %v635 = vmul.f32 %v590, %v615
    %v636 = vmul.f32 %v592, %v616
    %v637 = vadd.f32 %v633, %v635
    %v638 = vadd.f32 %v634, %v636
    %v639 = vtanh.pop %v637
    %v640 = vtanh.pop %v638
    %v641 = vmul.f32 %v630, %v639
    %v642 = vmul.f32 %v632, %v640
    %v645 = vunpack.c.l.s4 1966171168
    %v646 = vunpack.c.0.s8 %v645
    %v647 = vlaneseq
    %v648 = vshrl.u32 %v647, 7
    %v649 = vsub.s32 %v646, %v648
    %v650 = vrot.slane %v70, %v649
    %v651 = vcombine.high %v650, %v650
    %v653 = vunpack.c.l.s4 1966171168
    %v654 = vunpack.c.0.s8 %v653
    %v655 = vlaneseq
    %v656 = vshrl.u32 %v655, 7
    %v657 = vsub.s32 %v654, %v656
    %v658 = vrot.slane %v650, %v657
    %v660 = vunpack.c.l.s4 1966171168
    %v661 = vunpack.c.0.s8 %v660
    %v662 = vlaneseq
    %v663 = vshrl.u32 %v662, 7
    %v664 = vsub.s32 %v661, %v663
    %v665 = vrot.slane %v651, %v664
    %v668 = vmul.f32 %v641, %v658
    %v669 = vmul.f32 %v642, %v665
    %v672 = vcombine.low %v668, %v669
    %v674 = vunpack.c.l.s4 1966171168
    %v675 = vunpack.c.0.s8 %v674
    %v676 = vlaneseq
    %v677 = vshrl.u32 %v676, 7
    %v678 = vsub.s32 %v675, %v677
    %v679 = vrot.slane %v672, %v678
    %v681 = vunpack.c.l.s4 1966171168
    %v682 = vunpack.c.0.s8 %v681
    %v683 = vlaneseq
    %v684 = vshrl.u32 %v683, 7
    %v685 = vsub.s32 %v682, %v684
    %v686 = vrot.slane %v679, %v685
    %vm688 = vcmask 1041408
    %v689 = vsel %vm688, %v686, 0.0
    %690 = vadd.xlane.f32.xlu0 %v689
    %v691 = vpop.xlane.xlu0 %690
    %v692 = vld [vmem:[%s3] sm:$0x1]
    %v693 = vlaneseq
    %v694 = vshrl.u32 %v693, 7
    %v695 = vsub.s32 0, %v694
    %v696 = vrot.slane %v692, %v695
    %v697 = vmul.f32 %v691, %v696
    %v698 = vadd.f32 %v71, %v697
    %s699 = scalar_lea.vmem [#allocation2], 1
    %v700 = vld [vmem:[%s699] ss:$8 sm:$0xf]
    %s701 = scalar_lea.vmem [#allocation2], 33
    %v702 = vld [vmem:[%s701] ss:$8 sm:$0xf]
    %v703 = vpack.c.bf16 %v641, %v641
    %v704 = vpack.c.bf16 %v642, %v642
    %v707 = vunpack.c.l.b16 %v703
    %v708 = vunpack.c.l.b16 %v704
    %v709 = vrot.slane %v708, 7
    %vm710 = vcmask 1041409
    %v711 = vsel %vm710, %v709, %v707
    %v712 = vpack.c.b16 %v711, %v711
    %714 = vmatprep.subr.bf16.mxu0 %v424
    %715 = vmatpush1.bf16.msra.mxu0 %v423
    %716 = vmatprep.subr.bf16.mxu0 %v420
    %717 = vmatpush1.bf16.msra.mxu0 %v419
    %718 = vmatprep.subr.bf16.mxu0 %v416
    %719 = vmatpush1.bf16.msra.mxu0 %v415
    %720 = vmatprep.subr.bf16.mxu0 %v412
    %721 = vmatpush1.bf16.msra.mxu0 %v411
    %722 = vmatprep.subr.bf16.mxu0 %v408
    %723 = vmatpush1.bf16.msra.mxu0 %v407
    %724 = vmatprep.subr.bf16.mxu0 %v404
    %725 = vmatpush1.bf16.msra.mxu0 %v403
    %726 = vmatprep.subr.bf16.mxu0 %v400
    %727 = vmatpush1.bf16.msra.mxu0 %v399
    %728 = vmatprep.subr.bf16.mxu0 %v396
    %729 = vmatpush1.bf16.msra.mxu0 %v395
    %730 = vmatprep.subr.bf16.mxu0 0
    %731 = vmatpush2.bf16.msra.mxu0 0
    %732 = vmatprep.subr.bf16.mxu0 0
    %733 = vmatpush2.bf16.msra.mxu0 0
    %734 = vmatprep.subr.bf16.mxu0 0
    %735 = vmatpush2.bf16.msra.mxu0 0
    %736 = vmatprep.subr.bf16.mxu0 0
    %737 = vmatpush2.bf16.msra.mxu0 0
    %738 = vmatprep.subr.bf16.mxu0 0
    %739 = vmatpush2.bf16.msra.mxu0 0
    %740 = vmatprep.subr.bf16.mxu0 0
    %741 = vmatpush2.bf16.msra.mxu0 0
    %742 = vmatprep.subr.bf16.mxu0 0
    %743 = vmatpush2.bf16.msra.mxu0 0
    %744 = vmatprep.subr.bf16.mxu0 0
    %745 = vmatpush2.bf16.msra.mxu0 0
    %746 = vmatprep.mubr.bf16.mxu0 0
    %747 = vmatmul.mubr.bf16.gmra.mxu0 %v712
    %v748 = vpop.f32.mrf.mxu0
    %v749 = vadd.f32 0.0, %v748
    %v750 = vpop.f32.mrf.mxu0
    %v751 = vadd.f32 0.0, %v750
    %v752 = vpop.f32.mrf.mxu0
    %v753 = vpop.f32.mrf.mxu0
    %754 = vdwg.mxu0
    %755 = vmatprep.subr.bf16.mxu0 %v426
    %756 = vmatpush1.bf16.msra.mxu0 %v425
    %757 = vmatprep.subr.bf16.mxu0 %v422
    %758 = vmatpush1.bf16.msra.mxu0 %v421
    %759 = vmatprep.subr.bf16.mxu0 %v418
    %760 = vmatpush1.bf16.msra.mxu0 %v417
    %761 = vmatprep.subr.bf16.mxu0 %v414
    %762 = vmatpush1.bf16.msra.mxu0 %v413
    %763 = vmatprep.subr.bf16.mxu0 %v410
    %764 = vmatpush1.bf16.msra.mxu0 %v409
    %765 = vmatprep.subr.bf16.mxu0 %v406
    %766 = vmatpush1.bf16.msra.mxu0 %v405
    %767 = vmatprep.subr.bf16.mxu0 %v402
    %768 = vmatpush1.bf16.msra.mxu0 %v401
    %769 = vmatprep.subr.bf16.mxu0 %v398
    %770 = vmatpush1.bf16.msra.mxu0 %v397
    %771 = vmatprep.subr.bf16.mxu0 0
    %772 = vmatpush2.bf16.msra.mxu0 0
    %773 = vmatprep.subr.bf16.mxu0 0
    %774 = vmatpush2.bf16.msra.mxu0 0
    %775 = vmatprep.subr.bf16.mxu0 0
    %776 = vmatpush2.bf16.msra.mxu0 0
    %777 = vmatprep.subr.bf16.mxu0 0
    %778 = vmatpush2.bf16.msra.mxu0 0
    %779 = vmatprep.subr.bf16.mxu0 0
    %780 = vmatpush2.bf16.msra.mxu0 0
    %781 = vmatprep.subr.bf16.mxu0 0
    %782 = vmatpush2.bf16.msra.mxu0 0
    %783 = vmatprep.subr.bf16.mxu0 0
    %784 = vmatpush2.bf16.msra.mxu0 0
    %785 = vmatprep.subr.bf16.mxu0 0
    %786 = vmatpush2.bf16.msra.mxu0 0
    %787 = vmatprep.mubr.bf16.mxu0 0
    %788 = vmatmul.mubr.bf16.gmra.mxu0 %v712
    %v789 = vpop.f32.mrf.mxu0
    %v790 = vadd.f32 0.0, %v789
    %v791 = vpop.f32.mrf.mxu0
    %v792 = vadd.f32 0.0, %v791
    %v793 = vpop.f32.mrf.mxu0
    %v794 = vpop.f32.mrf.mxu0
    %795 = vdwg.mxu0
    %v800 = vcombine.low %v749, %v751
    %v801 = vcombine.low %v790, %v792
    %v803 = vunpack.c.l.s4 1966171168
    %v804 = vunpack.c.0.s8 %v803
    %v805 = vlaneseq
    %v806 = vshrl.u32 %v805, 7
    %v807 = vsub.s32 %v804, %v806
    %v808 = vrot.slane %v800, %v807
    %v810 = vunpack.c.l.s4 1966171168
    %v811 = vunpack.c.0.s8 %v810
    %v812 = vlaneseq
    %v813 = vshrl.u32 %v812, 7
    %v814 = vsub.s32 %v811, %v813
    %v815 = vrot.slane %v801, %v814
    %v816 = vcombine.low %v808, %v815
    %v817 = vcombine.high %v808, %v815
    %v819 = vunpack.c.l.s4 1966171168
    %v820 = vunpack.c.0.s8 %v819
    %v821 = vlaneseq
    %v822 = vshrl.u32 %v821, 7
    %v823 = vsub.s32 %v820, %v822
    %v824 = vrot.slane %v816, %v823
    %v826 = vunpack.c.l.s4 1966171168
    %v827 = vunpack.c.0.s8 %v826
    %v828 = vlaneseq
    %v829 = vshrl.u32 %v828, 7
    %v830 = vsub.s32 %v827, %v829
    %v831 = vrot.slane %v817, %v830
    %v834 = vadd.f32 %v700, %v824
    %v835 = vadd.f32 %v702, %v831
    %v836 = vxor.u32 %v834, 2147483648
    %v837 = vxor.u32 %v835, 2147483648
    %v838 = vmul.f32 %v836, 1.442695
    %v839 = vpow.pop %v838
    %v840 = vmul.f32 %v837, 1.442695
    %v841 = vpow.pop %v840
    %v842 = vadd.f32 %v839, 1.0
    %v843 = vadd.f32 %v841, 1.0
    %v844 = vrcp.pop %v842
    %v845 = vmul.f32 1.0, %v844
    %v846 = vrcp.pop %v843
    %v847 = vmul.f32 1.0, %v846
    %v850 = vrot.slane %v834, 1
    %v851 = vrot.slane %v835, 1
    %v854 = vxor.u32 %v850, 2147483648
    %v855 = vxor.u32 %v851, 2147483648
    %v856 = vmul.f32 %v854, 1.442695
    %v857 = vpow.pop %v856
    %v858 = vmul.f32 %v855, 1.442695
    %v859 = vpow.pop %v858
    %v860 = vadd.f32 %v857, 1.0
    %v861 = vadd.f32 %v859, 1.0
    %v862 = vrcp.pop %v860
    %v863 = vmul.f32 1.0, %v862
    %v864 = vrcp.pop %v861
    %v865 = vmul.f32 1.0, %v864
    %v866 = vrot.slane %v834, 2
    %v867 = vrot.slane %v835, 2
    %v870 = vtanh.pop %v866
    %v871 = vtanh.pop %v867
    %v872 = vrot.slane %v834, 3
    %v873 = vrot.slane %v835, 3
    %v876 = vxor.u32 %v872, 2147483648
    %v877 = vxor.u32 %v873, 2147483648
    %v878 = vmul.f32 %v876, 1.442695
    %v879 = vpow.pop %v878
    %v880 = vmul.f32 %v877, 1.442695
    %v881 = vpow.pop %v880
    %v882 = vadd.f32 %v879, 1.0
    %v883 = vadd.f32 %v881, 1.0
    %v884 = vrcp.pop %v882
    %v885 = vmul.f32 1.0, %v884
    %v886 = vrcp.pop %v883
    %v887 = vmul.f32 1.0, %v886
    %v888 = vmul.f32 %v863, %v637
    %v889 = vmul.f32 %v865, %v638
    %v890 = vmul.f32 %v845, %v870
    %v891 = vmul.f32 %v847, %v871
    %v892 = vadd.f32 %v888, %v890
    %v893 = vadd.f32 %v889, %v891
    %v894 = vtanh.pop %v892
    %v895 = vtanh.pop %v893
    %v896 = vmul.f32 %v885, %v894
    %v897 = vmul.f32 %v887, %v895
    %v898 = vmul.f32 %v896, %v658
    %v899 = vmul.f32 %v897, %v665
    %v902 = vcombine.low %v898, %v899
    %v904 = vunpack.c.l.s4 1966171168
    %v905 = vunpack.c.0.s8 %v904
    %v906 = vlaneseq
    %v907 = vshrl.u32 %v906, 7
    %v908 = vsub.s32 %v905, %v907
    %v909 = vrot.slane %v902, %v908
    %v911 = vunpack.c.l.s4 1966171168
    %v912 = vunpack.c.0.s8 %v911
    %v913 = vlaneseq
    %v914 = vshrl.u32 %v913, 7
    %v915 = vsub.s32 %v912, %v914
    %v916 = vrot.slane %v909, %v915
    %v918 = vsel %vm688, %v916, 0.0
    %919 = vadd.xlane.f32.xlu0 %v918
    %v920 = vpop.xlane.xlu0 %919
    %v921 = vld [vmem:[%s3 + $0x1] sm:$0x1]
    %v922 = vlaneseq
    %v923 = vshrl.u32 %v922, 7
    %v924 = vsub.s32 0, %v923
    %v925 = vrot.slane %v921, %v924
    %v926 = vmul.f32 %v920, %v925
    %v927 = vadd.f32 %v698, %v926
    %s928 = scalar_lea.vmem [#allocation2], 2
    %v929 = vld [vmem:[%s928] ss:$8 sm:$0xf]
    %s930 = scalar_lea.vmem [#allocation2], 34
    %v931 = vld [vmem:[%s930] ss:$8 sm:$0xf]
    %v932 = vpack.c.bf16 %v896, %v896
    %v933 = vpack.c.bf16 %v897, %v897
    %v936 = vunpack.c.l.b16 %v932
    %v937 = vunpack.c.l.b16 %v933
    %v938 = vrot.slane %v937, 7
    %v939 = vsel %vm710, %v938, %v936
    %v940 = vpack.c.b16 %v939, %v939
    %942 = vmatprep.subr.bf16.mxu0 %v424
    %943 = vmatpush1.bf16.msra.mxu0 %v423
    %944 = vmatprep.subr.bf16.mxu0 %v420
    %945 = vmatpush1.bf16.msra.mxu0 %v419
    %946 = vmatprep.subr.bf16.mxu0 %v416
    %947 = vmatpush1.bf16.msra.mxu0 %v415
    %948 = vmatprep.subr.bf16.mxu0 %v412
    %949 = vmatpush1.bf16.msra.mxu0 %v411
    %950 = vmatprep.subr.bf16.mxu0 %v408
    %951 = vmatpush1.bf16.msra.mxu0 %v407
    %952 = vmatprep.subr.bf16.mxu0 %v404
    %953 = vmatpush1.bf16.msra.mxu0 %v403
    %954 = vmatprep.subr.bf16.mxu0 %v400
    %955 = vmatpush1.bf16.msra.mxu0 %v399
    %956 = vmatprep.subr.bf16.mxu0 %v396
    %957 = vmatpush1.bf16.msra.mxu0 %v395
    %958 = vmatprep.subr.bf16.mxu0 0
    %959 = vmatpush2.bf16.msra.mxu0 0
    %960 = vmatprep.subr.bf16.mxu0 0
    %961 = vmatpush2.bf16.msra.mxu0 0
    %962 = vmatprep.subr.bf16.mxu0 0
    %963 = vmatpush2.bf16.msra.mxu0 0
    %964 = vmatprep.subr.bf16.mxu0 0
    %965 = vmatpush2.bf16.msra.mxu0 0
    %966 = vmatprep.subr.bf16.mxu0 0
    %967 = vmatpush2.bf16.msra.mxu0 0
    %968 = vmatprep.subr.bf16.mxu0 0
    %969 = vmatpush2.bf16.msra.mxu0 0
    %970 = vmatprep.subr.bf16.mxu0 0
    %971 = vmatpush2.bf16.msra.mxu0 0
    %972 = vmatprep.subr.bf16.mxu0 0
    %973 = vmatpush2.bf16.msra.mxu0 0
    %974 = vmatprep.mubr.bf16.mxu0 0
    %975 = vmatmul.mubr.bf16.gmra.mxu0 %v940
    %v976 = vpop.f32.mrf.mxu0
    %v977 = vadd.f32 0.0, %v976
    %v978 = vpop.f32.mrf.mxu0
    %v979 = vadd.f32 0.0, %v978
    %v980 = vpop.f32.mrf.mxu0
    %v981 = vpop.f32.mrf.mxu0
    %982 = vdwg.mxu0
    %983 = vmatprep.subr.bf16.mxu0 %v426
    %984 = vmatpush1.bf16.msra.mxu0 %v425
    %985 = vmatprep.subr.bf16.mxu0 %v422
    %986 = vmatpush1.bf16.msra.mxu0 %v421
    %987 = vmatprep.subr.bf16.mxu0 %v418
    %988 = vmatpush1.bf16.msra.mxu0 %v417
    %989 = vmatprep.subr.bf16.mxu0 %v414
    %990 = vmatpush1.bf16.msra.mxu0 %v413
    %991 = vmatprep.subr.bf16.mxu0 %v410
    %992 = vmatpush1.bf16.msra.mxu0 %v409
    %993 = vmatprep.subr.bf16.mxu0 %v406
    %994 = vmatpush1.bf16.msra.mxu0 %v405
    %995 = vmatprep.subr.bf16.mxu0 %v402
    %996 = vmatpush1.bf16.msra.mxu0 %v401
    %997 = vmatprep.subr.bf16.mxu0 %v398
    %998 = vmatpush1.bf16.msra.mxu0 %v397
    %999 = vmatprep.subr.bf16.mxu0 0
    %1000 = vmatpush2.bf16.msra.mxu0 0
    %1001 = vmatprep.subr.bf16.mxu0 0
    %1002 = vmatpush2.bf16.msra.mxu0 0
    %1003 = vmatprep.subr.bf16.mxu0 0
    %1004 = vmatpush2.bf16.msra.mxu0 0
    %1005 = vmatprep.subr.bf16.mxu0 0
    %1006 = vmatpush2.bf16.msra.mxu0 0
    %1007 = vmatprep.subr.bf16.mxu0 0
    %1008 = vmatpush2.bf16.msra.mxu0 0
    %1009 = vmatprep.subr.bf16.mxu0 0
    %1010 = vmatpush2.bf16.msra.mxu0 0
    %1011 = vmatprep.subr.bf16.mxu0 0
    %1012 = vmatpush2.bf16.msra.mxu0 0
    %1013 = vmatprep.subr.bf16.mxu0 0
    %1014 = vmatpush2.bf16.msra.mxu0 0
    %1015 = vmatprep.mubr.bf16.mxu0 0
    %1016 = vmatmul.mubr.bf16.gmra.mxu0 %v940
    %v1017 = vpop.f32.mrf.mxu0
    %v1018 = vadd.f32 0.0, %v1017
    %v1019 = vpop.f32.mrf.mxu0
    %v1020 = vadd.f32 0.0, %v1019
    %v1021 = vpop.f32.mrf.mxu0
    %v1022 = vpop.f32.mrf.mxu0
    %1023 = vdwg.mxu0
    %v1028 = vcombine.low %v977, %v979
    %v1029 = vcombine.low %v1018, %v1020
    %v1031 = vunpack.c.l.s4 1966171168
    %v1032 = vunpack.c.0.s8 %v1031
    %v1033 = vlaneseq
    %v1034 = vshrl.u32 %v1033, 7
    %v1035 = vsub.s32 %v1032, %v1034
    %v1036 = vrot.slane %v1028, %v1035
    %v1038 = vunpack.c.l.s4 1966171168
    %v1039 = vunpack.c.0.s8 %v1038
    %v1040 = vlaneseq
    %v1041 = vshrl.u32 %v1040, 7
    %v1042 = vsub.s32 %v1039, %v1041
    %v1043 = vrot.slane %v1029, %v1042
    %v1044 = vcombine.low %v1036, %v1043
    %v1045 = vcombine.high %v1036, %v1043
    %v1047 = vunpack.c.l.s4 1966171168
    %v1048 = vunpack.c.0.s8 %v1047
    %v1049 = vlaneseq
    %v1050 = vshrl.u32 %v1049, 7
    %v1051 = vsub.s32 %v1048, %v1050
    %v1052 = vrot.slane %v1044, %v1051
    %v1054 = vunpack.c.l.s4 1966171168
    %v1055 = vunpack.c.0.s8 %v1054
    %v1056 = vlaneseq
    %v1057 = vshrl.u32 %v1056, 7
    %v1058 = vsub.s32 %v1055, %v1057
    %v1059 = vrot.slane %v1045, %v1058
    %v1062 = vadd.f32 %v929, %v1052
    %v1063 = vadd.f32 %v931, %v1059
    %v1064 = vxor.u32 %v1062, 2147483648
    %v1065 = vxor.u32 %v1063, 2147483648
    %v1066 = vmul.f32 %v1064, 1.442695
    %v1067 = vpow.pop %v1066
    %v1068 = vmul.f32 %v1065, 1.442695
    %v1069 = vpow.pop %v1068
    %v1070 = vadd.f32 %v1067, 1.0
    %v1071 = vadd.f32 %v1069, 1.0
    %v1072 = vrcp.pop %v1070
    %v1073 = vmul.f32 1.0, %v1072
    %v1074 = vrcp.pop %v1071
    %v1075 = vmul.f32 1.0, %v1074
    %v1078 = vrot.slane %v1062, 1
    %v1079 = vrot.slane %v1063, 1
    %v1082 = vxor.u32 %v1078, 2147483648
    %v1083 = vxor.u32 %v1079, 2147483648
    %v1084 = vmul.f32 %v1082, 1.442695
    %v1085 = vpow.pop %v1084
    %v1086 = vmul.f32 %v1083, 1.442695
    %v1087 = vpow.pop %v1086
    %v1088 = vadd.f32 %v1085, 1.0
    %v1089 = vadd.f32 %v1087, 1.0
    %v1090 = vrcp.pop %v1088
    %v1091 = vmul.f32 1.0, %v1090
    %v1092 = vrcp.pop %v1089
    %v1093 = vmul.f32 1.0, %v1092
    %v1094 = vrot.slane %v1062, 2
    %v1095 = vrot.slane %v1063, 2
    %v1098 = vtanh.pop %v1094
    %v1099 = vtanh.pop %v1095
    %v1100 = vrot.slane %v1062, 3
    %v1101 = vrot.slane %v1063, 3
    %v1104 = vxor.u32 %v1100, 2147483648
    %v1105 = vxor.u32 %v1101, 2147483648
    %v1106 = vmul.f32 %v1104, 1.442695
    %v1107 = vpow.pop %v1106
    %v1108 = vmul.f32 %v1105, 1.442695
    %v1109 = vpow.pop %v1108
    %v1110 = vadd.f32 %v1107, 1.0
    %v1111 = vadd.f32 %v1109, 1.0
    %v1112 = vrcp.pop %v1110
    %v1113 = vmul.f32 1.0, %v1112
    %v1114 = vrcp.pop %v1111
    %v1115 = vmul.f32 1.0, %v1114
    %v1116 = vmul.f32 %v1091, %v892
    %v1117 = vmul.f32 %v1093, %v893
    %v1118 = vmul.f32 %v1073, %v1098
    %v1119 = vmul.f32 %v1075, %v1099
    %v1120 = vadd.f32 %v1116, %v1118
    %v1121 = vadd.f32 %v1117, %v1119
    %v1122 = vtanh.pop %v1120
    %v1123 = vtanh.pop %v1121
    %v1124 = vmul.f32 %v1113, %v1122
    %v1125 = vmul.f32 %v1115, %v1123
    %v1126 = vmul.f32 %v1124, %v658
    %v1127 = vmul.f32 %v1125, %v665
    %v1130 = vcombine.low %v1126, %v1127
    %v1132 = vunpack.c.l.s4 1966171168
    %v1133 = vunpack.c.0.s8 %v1132
    %v1134 = vlaneseq
    %v1135 = vshrl.u32 %v1134, 7
    %v1136 = vsub.s32 %v1133, %v1135
    %v1137 = vrot.slane %v1130, %v1136
    %v1139 = vunpack.c.l.s4 1966171168
    %v1140 = vunpack.c.0.s8 %v1139
    %v1141 = vlaneseq
    %v1142 = vshrl.u32 %v1141, 7
    %v1143 = vsub.s32 %v1140, %v1142
    %v1144 = vrot.slane %v1137, %v1143
    %v1146 = vsel %vm688, %v1144, 0.0
    %1147 = vadd.xlane.f32.xlu0 %v1146
    %v1148 = vpop.xlane.xlu0 %1147
    %v1149 = vld [vmem:[%s3 + $0x2] sm:$0x1]
    %v1150 = vlaneseq
    %v1151 = vshrl.u32 %v1150, 7
    %v1152 = vsub.s32 0, %v1151
    %v1153 = vrot.slane %v1149, %v1152
    %v1154 = vmul.f32 %v1148, %v1153
    %v1155 = vadd.f32 %v927, %v1154
    %s1156 = scalar_lea.vmem [#allocation2], 3
    %v1157 = vld [vmem:[%s1156] ss:$8 sm:$0xf]
    %s1158 = scalar_lea.vmem [#allocation2], 35
    %v1159 = vld [vmem:[%s1158] ss:$8 sm:$0xf]
    %v1160 = vpack.c.bf16 %v1124, %v1124
    %v1161 = vpack.c.bf16 %v1125, %v1125
    %v1164 = vunpack.c.l.b16 %v1160
    %v1165 = vunpack.c.l.b16 %v1161
    %v1166 = vrot.slane %v1165, 7
    %v1167 = vsel %vm710, %v1166, %v1164
    %v1168 = vpack.c.b16 %v1167, %v1167
    %1170 = vmatprep.subr.bf16.mxu0 %v424
    %1171 = vmatpush1.bf16.msra.mxu0 %v423
    %1172 = vmatprep.subr.bf16.mxu0 %v420
    %1173 = vmatpush1.bf16.msra.mxu0 %v419
    %1174 = vmatprep.subr.bf16.mxu0 %v416
    %1175 = vmatpush1.bf16.msra.mxu0 %v415
    %1176 = vmatprep.subr.bf16.mxu0 %v412
    %1177 = vmatpush1.bf16.msra.mxu0 %v411
    %1178 = vmatprep.subr.bf16.mxu0 %v408
    %1179 = vmatpush1.bf16.msra.mxu0 %v407
    %1180 = vmatprep.subr.bf16.mxu0 %v404
    %1181 = vmatpush1.bf16.msra.mxu0 %v403
    %1182 = vmatprep.subr.bf16.mxu0 %v400
    %1183 = vmatpush1.bf16.msra.mxu0 %v399
    %1184 = vmatprep.subr.bf16.mxu0 %v396
    %1185 = vmatpush1.bf16.msra.mxu0 %v395
    %1186 = vmatprep.subr.bf16.mxu0 0
    %1187 = vmatpush2.bf16.msra.mxu0 0
    %1188 = vmatprep.subr.bf16.mxu0 0
    %1189 = vmatpush2.bf16.msra.mxu0 0
    %1190 = vmatprep.subr.bf16.mxu0 0
    %1191 = vmatpush2.bf16.msra.mxu0 0
    %1192 = vmatprep.subr.bf16.mxu0 0
    %1193 = vmatpush2.bf16.msra.mxu0 0
    %1194 = vmatprep.subr.bf16.mxu0 0
    %1195 = vmatpush2.bf16.msra.mxu0 0
    %1196 = vmatprep.subr.bf16.mxu0 0
    %1197 = vmatpush2.bf16.msra.mxu0 0
    %1198 = vmatprep.subr.bf16.mxu0 0
    %1199 = vmatpush2.bf16.msra.mxu0 0
    %1200 = vmatprep.subr.bf16.mxu0 0
    %1201 = vmatpush2.bf16.msra.mxu0 0
    %1202 = vmatprep.mubr.bf16.mxu0 0
    %1203 = vmatmul.mubr.bf16.gmra.mxu0 %v1168
    %v1204 = vpop.f32.mrf.mxu0
    %v1205 = vadd.f32 0.0, %v1204
    %v1206 = vpop.f32.mrf.mxu0
    %v1207 = vadd.f32 0.0, %v1206
    %v1208 = vpop.f32.mrf.mxu0
    %v1209 = vpop.f32.mrf.mxu0
    %1210 = vdwg.mxu0
    %1211 = vmatprep.subr.bf16.mxu0 %v426
    %1212 = vmatpush1.bf16.msra.mxu0 %v425
    %1213 = vmatprep.subr.bf16.mxu0 %v422
    %1214 = vmatpush1.bf16.msra.mxu0 %v421
    %1215 = vmatprep.subr.bf16.mxu0 %v418
    %1216 = vmatpush1.bf16.msra.mxu0 %v417
    %1217 = vmatprep.subr.bf16.mxu0 %v414
    %1218 = vmatpush1.bf16.msra.mxu0 %v413
    %1219 = vmatprep.subr.bf16.mxu0 %v410
    %1220 = vmatpush1.bf16.msra.mxu0 %v409
    %1221 = vmatprep.subr.bf16.mxu0 %v406
    %1222 = vmatpush1.bf16.msra.mxu0 %v405
    %1223 = vmatprep.subr.bf16.mxu0 %v402
    %1224 = vmatpush1.bf16.msra.mxu0 %v401
    %1225 = vmatprep.subr.bf16.mxu0 %v398
    %1226 = vmatpush1.bf16.msra.mxu0 %v397
    %1227 = vmatprep.subr.bf16.mxu0 0
    %1228 = vmatpush2.bf16.msra.mxu0 0
    %1229 = vmatprep.subr.bf16.mxu0 0
    %1230 = vmatpush2.bf16.msra.mxu0 0
    %1231 = vmatprep.subr.bf16.mxu0 0
    %1232 = vmatpush2.bf16.msra.mxu0 0
    %1233 = vmatprep.subr.bf16.mxu0 0
    %1234 = vmatpush2.bf16.msra.mxu0 0
    %1235 = vmatprep.subr.bf16.mxu0 0
    %1236 = vmatpush2.bf16.msra.mxu0 0
    %1237 = vmatprep.subr.bf16.mxu0 0
    %1238 = vmatpush2.bf16.msra.mxu0 0
    %1239 = vmatprep.subr.bf16.mxu0 0
    %1240 = vmatpush2.bf16.msra.mxu0 0
    %1241 = vmatprep.subr.bf16.mxu0 0
    %1242 = vmatpush2.bf16.msra.mxu0 0
    %1243 = vmatprep.mubr.bf16.mxu0 0
    %1244 = vmatmul.mubr.bf16.gmra.mxu0 %v1168
    %v1245 = vpop.f32.mrf.mxu0
    %v1246 = vadd.f32 0.0, %v1245
    %v1247 = vpop.f32.mrf.mxu0
    %v1248 = vadd.f32 0.0, %v1247
    %v1249 = vpop.f32.mrf.mxu0
    %v1250 = vpop.f32.mrf.mxu0
    %1251 = vdwg.mxu0
    %v1256 = vcombine.low %v1205, %v1207
    %v1257 = vcombine.low %v1246, %v1248
    %v1259 = vunpack.c.l.s4 1966171168
    %v1260 = vunpack.c.0.s8 %v1259
    %v1261 = vlaneseq
    %v1262 = vshrl.u32 %v1261, 7
    %v1263 = vsub.s32 %v1260, %v1262
    %v1264 = vrot.slane %v1256, %v1263
    %v1266 = vunpack.c.l.s4 1966171168
    %v1267 = vunpack.c.0.s8 %v1266
    %v1268 = vlaneseq
    %v1269 = vshrl.u32 %v1268, 7
    %v1270 = vsub.s32 %v1267, %v1269
    %v1271 = vrot.slane %v1257, %v1270
    %v1272 = vcombine.low %v1264, %v1271
    %v1273 = vcombine.high %v1264, %v1271
    %v1275 = vunpack.c.l.s4 1966171168
    %v1276 = vunpack.c.0.s8 %v1275
    %v1277 = vlaneseq
    %v1278 = vshrl.u32 %v1277, 7
    %v1279 = vsub.s32 %v1276, %v1278
    %v1280 = vrot.slane %v1272, %v1279
    %v1282 = vunpack.c.l.s4 1966171168
    %v1283 = vunpack.c.0.s8 %v1282
    %v1284 = vlaneseq
    %v1285 = vshrl.u32 %v1284, 7
    %v1286 = vsub.s32 %v1283, %v1285
    %v1287 = vrot.slane %v1273, %v1286
    %v1290 = vadd.f32 %v1157, %v1280
    %v1291 = vadd.f32 %v1159, %v1287
    %v1292 = vxor.u32 %v1290, 2147483648
    %v1293 = vxor.u32 %v1291, 2147483648
    %v1294 = vmul.f32 %v1292, 1.442695
    %v1295 = vpow.pop %v1294
    %v1296 = vmul.f32 %v1293, 1.442695
    %v1297 = vpow.pop %v1296
    %v1298 = vadd.f32 %v1295, 1.0
    %v1299 = vadd.f32 %v1297, 1.0
    %v1300 = vrcp.pop %v1298
    %v1301 = vmul.f32 1.0, %v1300
    %v1302 = vrcp.pop %v1299
    %v1303 = vmul.f32 1.0, %v1302
    %v1306 = vrot.slane %v1290, 1
    %v1307 = vrot.slane %v1291, 1
    %v1310 = vxor.u32 %v1306, 2147483648
    %v1311 = vxor.u32 %v1307, 2147483648
    %v1312 = vmul.f32 %v1310, 1.442695
    %v1313 = vpow.pop %v1312
    %v1314 = vmul.f32 %v1311, 1.442695
    %v1315 = vpow.pop %v1314
    %v1316 = vadd.f32 %v1313, 1.0
    %v1317 = vadd.f32 %v1315, 1.0
    %v1318 = vrcp.pop %v1316
    %v1319 = vmul.f32 1.0, %v1318
    %v1320 = vrcp.pop %v1317
    %v1321 = vmul.f32 1.0, %v1320
    %v1322 = vrot.slane %v1290, 2
    %v1323 = vrot.slane %v1291, 2
    %v1326 = vtanh.pop %v1322
    %v1327 = vtanh.pop %v1323
    %v1328 = vrot.slane %v1290, 3
    %v1329 = vrot.slane %v1291, 3
    %v1332 = vxor.u32 %v1328, 2147483648
    %v1333 = vxor.u32 %v1329, 2147483648
    %v1334 = vmul.f32 %v1332, 1.442695
    %v1335 = vpow.pop %v1334
    %v1336 = vmul.f32 %v1333, 1.442695
    %v1337 = vpow.pop %v1336
    %v1338 = vadd.f32 %v1335, 1.0
    %v1339 = vadd.f32 %v1337, 1.0
    %v1340 = vrcp.pop %v1338
    %v1341 = vmul.f32 1.0, %v1340
    %v1342 = vrcp.pop %v1339
    %v1343 = vmul.f32 1.0, %v1342
    %v1344 = vmul.f32 %v1319, %v1120
    %v1345 = vmul.f32 %v1321, %v1121
    %v1346 = vmul.f32 %v1301, %v1326
    %v1347 = vmul.f32 %v1303, %v1327
    %v1348 = vadd.f32 %v1344, %v1346
    %v1349 = vadd.f32 %v1345, %v1347
    %v1350 = vtanh.pop %v1348
    %v1351 = vtanh.pop %v1349
    %v1352 = vmul.f32 %v1341, %v1350
    %v1353 = vmul.f32 %v1343, %v1351
    %v1354 = vmul.f32 %v1352, %v658
    %v1355 = vmul.f32 %v1353, %v665
    %v1358 = vcombine.low %v1354, %v1355
    %v1360 = vunpack.c.l.s4 1966171168
    %v1361 = vunpack.c.0.s8 %v1360
    %v1362 = vlaneseq
    %v1363 = vshrl.u32 %v1362, 7
    %v1364 = vsub.s32 %v1361, %v1363
    %v1365 = vrot.slane %v1358, %v1364
    %v1367 = vunpack.c.l.s4 1966171168
    %v1368 = vunpack.c.0.s8 %v1367
    %v1369 = vlaneseq
    %v1370 = vshrl.u32 %v1369, 7
    %v1371 = vsub.s32 %v1368, %v1370
    %v1372 = vrot.slane %v1365, %v1371
    %v1374 = vsel %vm688, %v1372, 0.0
    %1375 = vadd.xlane.f32.xlu0 %v1374
    %v1376 = vpop.xlane.xlu0 %1375
    %v1377 = vld [vmem:[%s3 + $0x3] sm:$0x1]
    %v1378 = vlaneseq
    %v1379 = vshrl.u32 %v1378, 7
    %v1380 = vsub.s32 0, %v1379
    %v1381 = vrot.slane %v1377, %v1380
    %v1382 = vmul.f32 %v1376, %v1381
    %v1383 = vadd.f32 %v1155, %v1382
    %s1384 = scalar_lea.vmem [#allocation2], 4
    %v1385 = vld [vmem:[%s1384] ss:$8 sm:$0xf]
    %s1386 = scalar_lea.vmem [#allocation2], 36
    %v1387 = vld [vmem:[%s1386] ss:$8 sm:$0xf]
    %v1388 = vpack.c.bf16 %v1352, %v1352
    %v1389 = vpack.c.bf16 %v1353, %v1353
    %v1392 = vunpack.c.l.b16 %v1388
    %v1393 = vunpack.c.l.b16 %v1389
    %v1394 = vrot.slane %v1393, 7
    %v1395 = vsel %vm710, %v1394, %v1392
    %v1396 = vpack.c.b16 %v1395, %v1395
    %1398 = vmatprep.subr.bf16.mxu0 %v424
    %1399 = vmatpush1.bf16.msra.mxu0 %v423
    %1400 = vmatprep.subr.bf16.mxu0 %v420
    %1401 = vmatpush1.bf16.msra.mxu0 %v419
    %1402 = vmatprep.subr.bf16.mxu0 %v416
    %1403 = vmatpush1.bf16.msra.mxu0 %v415
    %1404 = vmatprep.subr.bf16.mxu0 %v412
    %1405 = vmatpush1.bf16.msra.mxu0 %v411
    %1406 = vmatprep.subr.bf16.mxu0 %v408
    %1407 = vmatpush1.bf16.msra.mxu0 %v407
    %1408 = vmatprep.subr.bf16.mxu0 %v404
    %1409 = vmatpush1.bf16.msra.mxu0 %v403
    %1410 = vmatprep.subr.bf16.mxu0 %v400
    %1411 = vmatpush1.bf16.msra.mxu0 %v399
    %1412 = vmatprep.subr.bf16.mxu0 %v396
    %1413 = vmatpush1.bf16.msra.mxu0 %v395
    %1414 = vmatprep.subr.bf16.mxu0 0
    %1415 = vmatpush2.bf16.msra.mxu0 0
    %1416 = vmatprep.subr.bf16.mxu0 0
    %1417 = vmatpush2.bf16.msra.mxu0 0
    %1418 = vmatprep.subr.bf16.mxu0 0
    %1419 = vmatpush2.bf16.msra.mxu0 0
    %1420 = vmatprep.subr.bf16.mxu0 0
    %1421 = vmatpush2.bf16.msra.mxu0 0
    %1422 = vmatprep.subr.bf16.mxu0 0
    %1423 = vmatpush2.bf16.msra.mxu0 0
    %1424 = vmatprep.subr.bf16.mxu0 0
    %1425 = vmatpush2.bf16.msra.mxu0 0
    %1426 = vmatprep.subr.bf16.mxu0 0
    %1427 = vmatpush2.bf16.msra.mxu0 0
    %1428 = vmatprep.subr.bf16.mxu0 0
    %1429 = vmatpush2.bf16.msra.mxu0 0
    %1430 = vmatprep.mubr.bf16.mxu0 0
    %1431 = vmatmul.mubr.bf16.gmra.mxu0 %v1396
    %v1432 = vpop.f32.mrf.mxu0
    %v1433 = vadd.f32 0.0, %v1432
    %v1434 = vpop.f32.mrf.mxu0
    %v1435 = vadd.f32 0.0, %v1434
    %v1436 = vpop.f32.mrf.mxu0
    %v1437 = vpop.f32.mrf.mxu0
    %1438 = vdwg.mxu0
    %1439 = vmatprep.subr.bf16.mxu0 %v426
    %1440 = vmatpush1.bf16.msra.mxu0 %v425
    %1441 = vmatprep.subr.bf16.mxu0 %v422
    %1442 = vmatpush1.bf16.msra.mxu0 %v421
    %1443 = vmatprep.subr.bf16.mxu0 %v418
    %1444 = vmatpush1.bf16.msra.mxu0 %v417
    %1445 = vmatprep.subr.bf16.mxu0 %v414
    %1446 = vmatpush1.bf16.msra.mxu0 %v413
    %1447 = vmatprep.subr.bf16.mxu0 %v410
    %1448 = vmatpush1.bf16.msra.mxu0 %v409
    %1449 = vmatprep.subr.bf16.mxu0 %v406
    %1450 = vmatpush1.bf16.msra.mxu0 %v405
    %1451 = vmatprep.subr.bf16.mxu0 %v402
    %1452 = vmatpush1.bf16.msra.mxu0 %v401
    %1453 = vmatprep.subr.bf16.mxu0 %v398
    %1454 = vmatpush1.bf16.msra.mxu0 %v397
    %1455 = vmatprep.subr.bf16.mxu0 0
    %1456 = vmatpush2.bf16.msra.mxu0 0
    %1457 = vmatprep.subr.bf16.mxu0 0
    %1458 = vmatpush2.bf16.msra.mxu0 0
    %1459 = vmatprep.subr.bf16.mxu0 0
    %1460 = vmatpush2.bf16.msra.mxu0 0
    %1461 = vmatprep.subr.bf16.mxu0 0
    %1462 = vmatpush2.bf16.msra.mxu0 0
    %1463 = vmatprep.subr.bf16.mxu0 0
    %1464 = vmatpush2.bf16.msra.mxu0 0
    %1465 = vmatprep.subr.bf16.mxu0 0
    %1466 = vmatpush2.bf16.msra.mxu0 0
    %1467 = vmatprep.subr.bf16.mxu0 0
    %1468 = vmatpush2.bf16.msra.mxu0 0
    %1469 = vmatprep.subr.bf16.mxu0 0
    %1470 = vmatpush2.bf16.msra.mxu0 0
    %1471 = vmatprep.mubr.bf16.mxu0 0
    %1472 = vmatmul.mubr.bf16.gmra.mxu0 %v1396
    %v1473 = vpop.f32.mrf.mxu0
    %v1474 = vadd.f32 0.0, %v1473
    %v1475 = vpop.f32.mrf.mxu0
    %v1476 = vadd.f32 0.0, %v1475
    %v1477 = vpop.f32.mrf.mxu0
    %v1478 = vpop.f32.mrf.mxu0
    %1479 = vdwg.mxu0
    %v1484 = vcombine.low %v1433, %v1435
    %v1485 = vcombine.low %v1474, %v1476
    %v1487 = vunpack.c.l.s4 1966171168
    %v1488 = vunpack.c.0.s8 %v1487
    %v1489 = vlaneseq
    %v1490 = vshrl.u32 %v1489, 7
    %v1491 = vsub.s32 %v1488, %v1490
    %v1492 = vrot.slane %v1484, %v1491
    %v1494 = vunpack.c.l.s4 1966171168
    %v1495 = vunpack.c.0.s8 %v1494
    %v1496 = vlaneseq
    %v1497 = vshrl.u32 %v1496, 7
    %v1498 = vsub.s32 %v1495, %v1497
    %v1499 = vrot.slane %v1485, %v1498
    %v1500 = vcombine.low %v1492, %v1499
    %v1501 = vcombine.high %v1492, %v1499
    %v1503 = vunpack.c.l.s4 1966171168
    %v1504 = vunpack.c.0.s8 %v1503
    %v1505 = vlaneseq
    %v1506 = vshrl.u32 %v1505, 7
    %v1507 = vsub.s32 %v1504, %v1506
    %v1508 = vrot.slane %v1500, %v1507
    %v1510 = vunpack.c.l.s4 1966171168
    %v1511 = vunpack.c.0.s8 %v1510
    %v1512 = vlaneseq
    %v1513 = vshrl.u32 %v1512, 7
    %v1514 = vsub.s32 %v1511, %v1513
    %v1515 = vrot.slane %v1501, %v1514
    %v1518 = vadd.f32 %v1385, %v1508
    %v1519 = vadd.f32 %v1387, %v1515
    %v1520 = vxor.u32 %v1518, 2147483648
    %v1521 = vxor.u32 %v1519, 2147483648
    %v1522 = vmul.f32 %v1520, 1.442695
    %v1523 = vpow.pop %v1522
    %v1524 = vmul.f32 %v1521, 1.442695
    %v1525 = vpow.pop %v1524
    %v1526 = vadd.f32 %v1523, 1.0
    %v1527 = vadd.f32 %v1525, 1.0
    %v1528 = vrcp.pop %v1526
    %v1529 = vmul.f32 1.0, %v1528
    %v1530 = vrcp.pop %v1527
    %v1531 = vmul.f32 1.0, %v1530
    %v1534 = vrot.slane %v1518, 1
    %v1535 = vrot.slane %v1519, 1
    %v1538 = vxor.u32 %v1534, 2147483648
    %v1539 = vxor.u32 %v1535, 2147483648
    %v1540 = vmul.f32 %v1538, 1.442695
    %v1541 = vpow.pop %v1540
    %v1542 = vmul.f32 %v1539, 1.442695
    %v1543 = vpow.pop %v1542
    %v1544 = vadd.f32 %v1541, 1.0
    %v1545 = vadd.f32 %v1543, 1.0
    %v1546 = vrcp.pop %v1544
    %v1547 = vmul.f32 1.0, %v1546
    %v1548 = vrcp.pop %v1545
    %v1549 = vmul.f32 1.0, %v1548
    %v1550 = vrot.slane %v1518, 2
    %v1551 = vrot.slane %v1519, 2
    %v1554 = vtanh.pop %v1550
    %v1555 = vtanh.pop %v1551
    %v1556 = vrot.slane %v1518, 3
    %v1557 = vrot.slane %v1519, 3
    %v1560 = vxor.u32 %v1556, 2147483648
    %v1561 = vxor.u32 %v1557, 2147483648
    %v1562 = vmul.f32 %v1560, 1.442695
    %v1563 = vpow.pop %v1562
    %v1564 = vmul.f32 %v1561, 1.442695
    %v1565 = vpow.pop %v1564
    %v1566 = vadd.f32 %v1563, 1.0
    %v1567 = vadd.f32 %v1565, 1.0
    %v1568 = vrcp.pop %v1566
    %v1569 = vmul.f32 1.0, %v1568
    %v1570 = vrcp.pop %v1567
    %v1571 = vmul.f32 1.0, %v1570
    %v1572 = vmul.f32 %v1547, %v1348
    %v1573 = vmul.f32 %v1549, %v1349
    %v1574 = vmul.f32 %v1529, %v1554
    %v1575 = vmul.f32 %v1531, %v1555
    %v1576 = vadd.f32 %v1572, %v1574
    %v1577 = vadd.f32 %v1573, %v1575
    %v1578 = vtanh.pop %v1576
    %v1579 = vtanh.pop %v1577
    %v1580 = vmul.f32 %v1569, %v1578
    %v1581 = vmul.f32 %v1571, %v1579
    %v1582 = vmul.f32 %v1580, %v658
    %v1583 = vmul.f32 %v1581, %v665
    %v1586 = vcombine.low %v1582, %v1583
    %v1588 = vunpack.c.l.s4 1966171168
    %v1589 = vunpack.c.0.s8 %v1588
    %v1590 = vlaneseq
    %v1591 = vshrl.u32 %v1590, 7
    %v1592 = vsub.s32 %v1589, %v1591
    %v1593 = vrot.slane %v1586, %v1592
    %v1595 = vunpack.c.l.s4 1966171168
    %v1596 = vunpack.c.0.s8 %v1595
    %v1597 = vlaneseq
    %v1598 = vshrl.u32 %v1597, 7
    %v1599 = vsub.s32 %v1596, %v1598
    %v1600 = vrot.slane %v1593, %v1599
    %v1602 = vsel %vm688, %v1600, 0.0
    %1603 = vadd.xlane.f32.xlu0 %v1602
    %v1604 = vpop.xlane.xlu0 %1603
    %v1605 = vld [vmem:[%s3 + $0x4] sm:$0x1]
    %v1606 = vlaneseq
    %v1607 = vshrl.u32 %v1606, 7
    %v1608 = vsub.s32 0, %v1607
    %v1609 = vrot.slane %v1605, %v1608
    %v1610 = vmul.f32 %v1604, %v1609
    %v1611 = vadd.f32 %v1383, %v1610
    %s1612 = scalar_lea.vmem [#allocation2], 5
    %v1613 = vld [vmem:[%s1612] ss:$8 sm:$0xf]
    %s1614 = scalar_lea.vmem [#allocation2], 37
    %v1615 = vld [vmem:[%s1614] ss:$8 sm:$0xf]
    %v1616 = vpack.c.bf16 %v1580, %v1580
    %v1617 = vpack.c.bf16 %v1581, %v1581
    %v1620 = vunpack.c.l.b16 %v1616
    %v1621 = vunpack.c.l.b16 %v1617
    %v1622 = vrot.slane %v1621, 7
    %v1623 = vsel %vm710, %v1622, %v1620
    %v1624 = vpack.c.b16 %v1623, %v1623
    %1626 = vmatprep.subr.bf16.mxu0 %v424
    %1627 = vmatpush1.bf16.msra.mxu0 %v423
    %1628 = vmatprep.subr.bf16.mxu0 %v420
    %1629 = vmatpush1.bf16.msra.mxu0 %v419
    %1630 = vmatprep.subr.bf16.mxu0 %v416
    %1631 = vmatpush1.bf16.msra.mxu0 %v415
    %1632 = vmatprep.subr.bf16.mxu0 %v412
    %1633 = vmatpush1.bf16.msra.mxu0 %v411
    %1634 = vmatprep.subr.bf16.mxu0 %v408
    %1635 = vmatpush1.bf16.msra.mxu0 %v407
    %1636 = vmatprep.subr.bf16.mxu0 %v404
    %1637 = vmatpush1.bf16.msra.mxu0 %v403
    %1638 = vmatprep.subr.bf16.mxu0 %v400
    %1639 = vmatpush1.bf16.msra.mxu0 %v399
    %1640 = vmatprep.subr.bf16.mxu0 %v396
    %1641 = vmatpush1.bf16.msra.mxu0 %v395
    %1642 = vmatprep.subr.bf16.mxu0 0
    %1643 = vmatpush2.bf16.msra.mxu0 0
    %1644 = vmatprep.subr.bf16.mxu0 0
    %1645 = vmatpush2.bf16.msra.mxu0 0
    %1646 = vmatprep.subr.bf16.mxu0 0
    %1647 = vmatpush2.bf16.msra.mxu0 0
    %1648 = vmatprep.subr.bf16.mxu0 0
    %1649 = vmatpush2.bf16.msra.mxu0 0
    %1650 = vmatprep.subr.bf16.mxu0 0
    %1651 = vmatpush2.bf16.msra.mxu0 0
    %1652 = vmatprep.subr.bf16.mxu0 0
    %1653 = vmatpush2.bf16.msra.mxu0 0
    %1654 = vmatprep.subr.bf16.mxu0 0
    %1655 = vmatpush2.bf16.msra.mxu0 0
    %1656 = vmatprep.subr.bf16.mxu0 0
    %1657 = vmatpush2.bf16.msra.mxu0 0
    %1658 = vmatprep.mubr.bf16.mxu0 0
    %1659 = vmatmul.mubr.bf16.gmra.mxu0 %v1624
    %v1660 = vpop.f32.mrf.mxu0
    %v1661 = vadd.f32 0.0, %v1660
    %v1662 = vpop.f32.mrf.mxu0
    %v1663 = vadd.f32 0.0, %v1662
    %v1664 = vpop.f32.mrf.mxu0
    %v1665 = vpop.f32.mrf.mxu0
    %1666 = vdwg.mxu0
    %1667 = vmatprep.subr.bf16.mxu0 %v426
    %1668 = vmatpush1.bf16.msra.mxu0 %v425
    %1669 = vmatprep.subr.bf16.mxu0 %v422
    %1670 = vmatpush1.bf16.msra.mxu0 %v421
    %1671 = vmatprep.subr.bf16.mxu0 %v418
    %1672 = vmatpush1.bf16.msra.mxu0 %v417
    %1673 = vmatprep.subr.bf16.mxu0 %v414
    %1674 = vmatpush1.bf16.msra.mxu0 %v413
    %1675 = vmatprep.subr.bf16.mxu0 %v410
    %1676 = vmatpush1.bf16.msra.mxu0 %v409
    %1677 = vmatprep.subr.bf16.mxu0 %v406
    %1678 = vmatpush1.bf16.msra.mxu0 %v405
    %1679 = vmatprep.subr.bf16.mxu0 %v402
    %1680 = vmatpush1.bf16.msra.mxu0 %v401
    %1681 = vmatprep.subr.bf16.mxu0 %v398
    %1682 = vmatpush1.bf16.msra.mxu0 %v397
    %1683 = vmatprep.subr.bf16.mxu0 0
    %1684 = vmatpush2.bf16.msra.mxu0 0
    %1685 = vmatprep.subr.bf16.mxu0 0
    %1686 = vmatpush2.bf16.msra.mxu0 0
    %1687 = vmatprep.subr.bf16.mxu0 0
    %1688 = vmatpush2.bf16.msra.mxu0 0
    %1689 = vmatprep.subr.bf16.mxu0 0
    %1690 = vmatpush2.bf16.msra.mxu0 0
    %1691 = vmatprep.subr.bf16.mxu0 0
    %1692 = vmatpush2.bf16.msra.mxu0 0
    %1693 = vmatprep.subr.bf16.mxu0 0
    %1694 = vmatpush2.bf16.msra.mxu0 0
    %1695 = vmatprep.subr.bf16.mxu0 0
    %1696 = vmatpush2.bf16.msra.mxu0 0
    %1697 = vmatprep.subr.bf16.mxu0 0
    %1698 = vmatpush2.bf16.msra.mxu0 0
    %1699 = vmatprep.mubr.bf16.mxu0 0
    %1700 = vmatmul.mubr.bf16.gmra.mxu0 %v1624
    %v1701 = vpop.f32.mrf.mxu0
    %v1702 = vadd.f32 0.0, %v1701
    %v1703 = vpop.f32.mrf.mxu0
    %v1704 = vadd.f32 0.0, %v1703
    %v1705 = vpop.f32.mrf.mxu0
    %v1706 = vpop.f32.mrf.mxu0
    %1707 = vdwg.mxu0
    %v1712 = vcombine.low %v1661, %v1663
    %v1713 = vcombine.low %v1702, %v1704
    %v1715 = vunpack.c.l.s4 1966171168
    %v1716 = vunpack.c.0.s8 %v1715
    %v1717 = vlaneseq
    %v1718 = vshrl.u32 %v1717, 7
    %v1719 = vsub.s32 %v1716, %v1718
    %v1720 = vrot.slane %v1712, %v1719
    %v1722 = vunpack.c.l.s4 1966171168
    %v1723 = vunpack.c.0.s8 %v1722
    %v1724 = vlaneseq
    %v1725 = vshrl.u32 %v1724, 7
    %v1726 = vsub.s32 %v1723, %v1725
    %v1727 = vrot.slane %v1713, %v1726
    %v1728 = vcombine.low %v1720, %v1727
    %v1729 = vcombine.high %v1720, %v1727
    %v1731 = vunpack.c.l.s4 1966171168
    %v1732 = vunpack.c.0.s8 %v1731
    %v1733 = vlaneseq
    %v1734 = vshrl.u32 %v1733, 7
    %v1735 = vsub.s32 %v1732, %v1734
    %v1736 = vrot.slane %v1728, %v1735
    %v1738 = vunpack.c.l.s4 1966171168
    %v1739 = vunpack.c.0.s8 %v1738
    %v1740 = vlaneseq
    %v1741 = vshrl.u32 %v1740, 7
    %v1742 = vsub.s32 %v1739, %v1741
    %v1743 = vrot.slane %v1729, %v1742
    %v1746 = vadd.f32 %v1613, %v1736
    %v1747 = vadd.f32 %v1615, %v1743
    %v1748 = vxor.u32 %v1746, 2147483648
    %v1749 = vxor.u32 %v1747, 2147483648
    %v1750 = vmul.f32 %v1748, 1.442695
    %v1751 = vpow.pop %v1750
    %v1752 = vmul.f32 %v1749, 1.442695
    %v1753 = vpow.pop %v1752
    %v1754 = vadd.f32 %v1751, 1.0
    %v1755 = vadd.f32 %v1753, 1.0
    %v1756 = vrcp.pop %v1754
    %v1757 = vmul.f32 1.0, %v1756
    %v1758 = vrcp.pop %v1755
    %v1759 = vmul.f32 1.0, %v1758
    %v1762 = vrot.slane %v1746, 1
    %v1763 = vrot.slane %v1747, 1
    %v1766 = vxor.u32 %v1762, 2147483648
    %v1767 = vxor.u32 %v1763, 2147483648
    %v1768 = vmul.f32 %v1766, 1.442695
    %v1769 = vpow.pop %v1768
    %v1770 = vmul.f32 %v1767, 1.442695
    %v1771 = vpow.pop %v1770
    %v1772 = vadd.f32 %v1769, 1.0
    %v1773 = vadd.f32 %v1771, 1.0
    %v1774 = vrcp.pop %v1772
    %v1775 = vmul.f32 1.0, %v1774
    %v1776 = vrcp.pop %v1773
    %v1777 = vmul.f32 1.0, %v1776
    %v1778 = vrot.slane %v1746, 2
    %v1779 = vrot.slane %v1747, 2
    %v1782 = vtanh.pop %v1778
    %v1783 = vtanh.pop %v1779
    %v1784 = vrot.slane %v1746, 3
    %v1785 = vrot.slane %v1747, 3
    %v1788 = vxor.u32 %v1784, 2147483648
    %v1789 = vxor.u32 %v1785, 2147483648
    %v1790 = vmul.f32 %v1788, 1.442695
    %v1791 = vpow.pop %v1790
    %v1792 = vmul.f32 %v1789, 1.442695
    %v1793 = vpow.pop %v1792
    %v1794 = vadd.f32 %v1791, 1.0
    %v1795 = vadd.f32 %v1793, 1.0
    %v1796 = vrcp.pop %v1794
    %v1797 = vmul.f32 1.0, %v1796
    %v1798 = vrcp.pop %v1795
    %v1799 = vmul.f32 1.0, %v1798
    %v1800 = vmul.f32 %v1775, %v1576
    %v1801 = vmul.f32 %v1777, %v1577
    %v1802 = vmul.f32 %v1757, %v1782
    %v1803 = vmul.f32 %v1759, %v1783
    %v1804 = vadd.f32 %v1800, %v1802
    %v1805 = vadd.f32 %v1801, %v1803
    %v1806 = vtanh.pop %v1804
    %v1807 = vtanh.pop %v1805
    %v1808 = vmul.f32 %v1797, %v1806
    %v1809 = vmul.f32 %v1799, %v1807
    %v1810 = vmul.f32 %v1808, %v658
    %v1811 = vmul.f32 %v1809, %v665
    %v1814 = vcombine.low %v1810, %v1811
    %v1816 = vunpack.c.l.s4 1966171168
    %v1817 = vunpack.c.0.s8 %v1816
    %v1818 = vlaneseq
    %v1819 = vshrl.u32 %v1818, 7
    %v1820 = vsub.s32 %v1817, %v1819
    %v1821 = vrot.slane %v1814, %v1820
    %v1823 = vunpack.c.l.s4 1966171168
    %v1824 = vunpack.c.0.s8 %v1823
    %v1825 = vlaneseq
    %v1826 = vshrl.u32 %v1825, 7
    %v1827 = vsub.s32 %v1824, %v1826
    %v1828 = vrot.slane %v1821, %v1827
    %v1830 = vsel %vm688, %v1828, 0.0
    %1831 = vadd.xlane.f32.xlu0 %v1830
    %v1832 = vpop.xlane.xlu0 %1831
    %v1833 = vld [vmem:[%s3 + $0x5] sm:$0x1]
    %v1834 = vlaneseq
    %v1835 = vshrl.u32 %v1834, 7
    %v1836 = vsub.s32 0, %v1835
    %v1837 = vrot.slane %v1833, %v1836
    %v1838 = vmul.f32 %v1832, %v1837
    %v1839 = vadd.f32 %v1611, %v1838
    %s1840 = scalar_lea.vmem [#allocation2], 6
    %v1841 = vld [vmem:[%s1840] ss:$8 sm:$0xf]
    %s1842 = scalar_lea.vmem [#allocation2], 38
    %v1843 = vld [vmem:[%s1842] ss:$8 sm:$0xf]
    %v1844 = vpack.c.bf16 %v1808, %v1808
    %v1845 = vpack.c.bf16 %v1809, %v1809
    %v1848 = vunpack.c.l.b16 %v1844
    %v1849 = vunpack.c.l.b16 %v1845
    %v1850 = vrot.slane %v1849, 7
    %v1851 = vsel %vm710, %v1850, %v1848
    %v1852 = vpack.c.b16 %v1851, %v1851
    %1854 = vmatprep.subr.bf16.mxu0 %v424
    %1855 = vmatpush1.bf16.msra.mxu0 %v423
    %1856 = vmatprep.subr.bf16.mxu0 %v420
    %1857 = vmatpush1.bf16.msra.mxu0 %v419
    %1858 = vmatprep.subr.bf16.mxu0 %v416
    %1859 = vmatpush1.bf16.msra.mxu0 %v415
    %1860 = vmatprep.subr.bf16.mxu0 %v412
    %1861 = vmatpush1.bf16.msra.mxu0 %v411
    %1862 = vmatprep.subr.bf16.mxu0 %v408
    %1863 = vmatpush1.bf16.msra.mxu0 %v407
    %1864 = vmatprep.subr.bf16.mxu0 %v404
    %1865 = vmatpush1.bf16.msra.mxu0 %v403
    %1866 = vmatprep.subr.bf16.mxu0 %v400
    %1867 = vmatpush1.bf16.msra.mxu0 %v399
    %1868 = vmatprep.subr.bf16.mxu0 %v396
    %1869 = vmatpush1.bf16.msra.mxu0 %v395
    %1870 = vmatprep.subr.bf16.mxu0 0
    %1871 = vmatpush2.bf16.msra.mxu0 0
    %1872 = vmatprep.subr.bf16.mxu0 0
    %1873 = vmatpush2.bf16.msra.mxu0 0
    %1874 = vmatprep.subr.bf16.mxu0 0
    %1875 = vmatpush2.bf16.msra.mxu0 0
    %1876 = vmatprep.subr.bf16.mxu0 0
    %1877 = vmatpush2.bf16.msra.mxu0 0
    %1878 = vmatprep.subr.bf16.mxu0 0
    %1879 = vmatpush2.bf16.msra.mxu0 0
    %1880 = vmatprep.subr.bf16.mxu0 0
    %1881 = vmatpush2.bf16.msra.mxu0 0
    %1882 = vmatprep.subr.bf16.mxu0 0
    %1883 = vmatpush2.bf16.msra.mxu0 0
    %1884 = vmatprep.subr.bf16.mxu0 0
    %1885 = vmatpush2.bf16.msra.mxu0 0
    %1886 = vmatprep.mubr.bf16.mxu0 0
    %1887 = vmatmul.mubr.bf16.gmra.mxu0 %v1852
    %v1888 = vpop.f32.mrf.mxu0
    %v1889 = vadd.f32 0.0, %v1888
    %v1890 = vpop.f32.mrf.mxu0
    %v1891 = vadd.f32 0.0, %v1890
    %v1892 = vpop.f32.mrf.mxu0
    %v1893 = vpop.f32.mrf.mxu0
    %1894 = vdwg.mxu0
    %1895 = vmatprep.subr.bf16.mxu0 %v426
    %1896 = vmatpush1.bf16.msra.mxu0 %v425
    %1897 = vmatprep.subr.bf16.mxu0 %v422
    %1898 = vmatpush1.bf16.msra.mxu0 %v421
    %1899 = vmatprep.subr.bf16.mxu0 %v418
    %1900 = vmatpush1.bf16.msra.mxu0 %v417
    %1901 = vmatprep.subr.bf16.mxu0 %v414
    %1902 = vmatpush1.bf16.msra.mxu0 %v413
    %1903 = vmatprep.subr.bf16.mxu0 %v410
    %1904 = vmatpush1.bf16.msra.mxu0 %v409
    %1905 = vmatprep.subr.bf16.mxu0 %v406
    %1906 = vmatpush1.bf16.msra.mxu0 %v405
    %1907 = vmatprep.subr.bf16.mxu0 %v402
    %1908 = vmatpush1.bf16.msra.mxu0 %v401
    %1909 = vmatprep.subr.bf16.mxu0 %v398
    %1910 = vmatpush1.bf16.msra.mxu0 %v397
    %1911 = vmatprep.subr.bf16.mxu0 0
    %1912 = vmatpush2.bf16.msra.mxu0 0
    %1913 = vmatprep.subr.bf16.mxu0 0
    %1914 = vmatpush2.bf16.msra.mxu0 0
    %1915 = vmatprep.subr.bf16.mxu0 0
    %1916 = vmatpush2.bf16.msra.mxu0 0
    %1917 = vmatprep.subr.bf16.mxu0 0
    %1918 = vmatpush2.bf16.msra.mxu0 0
    %1919 = vmatprep.subr.bf16.mxu0 0
    %1920 = vmatpush2.bf16.msra.mxu0 0
    %1921 = vmatprep.subr.bf16.mxu0 0
    %1922 = vmatpush2.bf16.msra.mxu0 0
    %1923 = vmatprep.subr.bf16.mxu0 0
    %1924 = vmatpush2.bf16.msra.mxu0 0
    %1925 = vmatprep.subr.bf16.mxu0 0
    %1926 = vmatpush2.bf16.msra.mxu0 0
    %1927 = vmatprep.mubr.bf16.mxu0 0
    %1928 = vmatmul.mubr.bf16.gmra.mxu0 %v1852
    %v1929 = vpop.f32.mrf.mxu0
    %v1930 = vadd.f32 0.0, %v1929
    %v1931 = vpop.f32.mrf.mxu0
    %v1932 = vadd.f32 0.0, %v1931
    %v1933 = vpop.f32.mrf.mxu0
    %v1934 = vpop.f32.mrf.mxu0
    %1935 = vdwg.mxu0
    %v1940 = vcombine.low %v1889, %v1891
    %v1941 = vcombine.low %v1930, %v1932
    %v1943 = vunpack.c.l.s4 1966171168
    %v1944 = vunpack.c.0.s8 %v1943
    %v1945 = vlaneseq
    %v1946 = vshrl.u32 %v1945, 7
    %v1947 = vsub.s32 %v1944, %v1946
    %v1948 = vrot.slane %v1940, %v1947
    %v1950 = vunpack.c.l.s4 1966171168
    %v1951 = vunpack.c.0.s8 %v1950
    %v1952 = vlaneseq
    %v1953 = vshrl.u32 %v1952, 7
    %v1954 = vsub.s32 %v1951, %v1953
    %v1955 = vrot.slane %v1941, %v1954
    %v1956 = vcombine.low %v1948, %v1955
    %v1957 = vcombine.high %v1948, %v1955
    %v1959 = vunpack.c.l.s4 1966171168
    %v1960 = vunpack.c.0.s8 %v1959
    %v1961 = vlaneseq
    %v1962 = vshrl.u32 %v1961, 7
    %v1963 = vsub.s32 %v1960, %v1962
    %v1964 = vrot.slane %v1956, %v1963
    %v1966 = vunpack.c.l.s4 1966171168
    %v1967 = vunpack.c.0.s8 %v1966
    %v1968 = vlaneseq
    %v1969 = vshrl.u32 %v1968, 7
    %v1970 = vsub.s32 %v1967, %v1969
    %v1971 = vrot.slane %v1957, %v1970
    %v1974 = vadd.f32 %v1841, %v1964
    %v1975 = vadd.f32 %v1843, %v1971
    %v1976 = vxor.u32 %v1974, 2147483648
    %v1977 = vxor.u32 %v1975, 2147483648
    %v1978 = vmul.f32 %v1976, 1.442695
    %v1979 = vpow.pop %v1978
    %v1980 = vmul.f32 %v1977, 1.442695
    %v1981 = vpow.pop %v1980
    %v1982 = vadd.f32 %v1979, 1.0
    %v1983 = vadd.f32 %v1981, 1.0
    %v1984 = vrcp.pop %v1982
    %v1985 = vmul.f32 1.0, %v1984
    %v1986 = vrcp.pop %v1983
    %v1987 = vmul.f32 1.0, %v1986
    %v1990 = vrot.slane %v1974, 1
    %v1991 = vrot.slane %v1975, 1
    %v1994 = vxor.u32 %v1990, 2147483648
    %v1995 = vxor.u32 %v1991, 2147483648
    %v1996 = vmul.f32 %v1994, 1.442695
    %v1997 = vpow.pop %v1996
    %v1998 = vmul.f32 %v1995, 1.442695
    %v1999 = vpow.pop %v1998
    %v2000 = vadd.f32 %v1997, 1.0
    %v2001 = vadd.f32 %v1999, 1.0
    %v2002 = vrcp.pop %v2000
    %v2003 = vmul.f32 1.0, %v2002
    %v2004 = vrcp.pop %v2001
    %v2005 = vmul.f32 1.0, %v2004
    %v2006 = vrot.slane %v1974, 2
    %v2007 = vrot.slane %v1975, 2
    %v2010 = vtanh.pop %v2006
    %v2011 = vtanh.pop %v2007
    %v2012 = vrot.slane %v1974, 3
    %v2013 = vrot.slane %v1975, 3
    %v2016 = vxor.u32 %v2012, 2147483648
    %v2017 = vxor.u32 %v2013, 2147483648
    %v2018 = vmul.f32 %v2016, 1.442695
    %v2019 = vpow.pop %v2018
    %v2020 = vmul.f32 %v2017, 1.442695
    %v2021 = vpow.pop %v2020
    %v2022 = vadd.f32 %v2019, 1.0
    %v2023 = vadd.f32 %v2021, 1.0
    %v2024 = vrcp.pop %v2022
    %v2025 = vmul.f32 1.0, %v2024
    %v2026 = vrcp.pop %v2023
    %v2027 = vmul.f32 1.0, %v2026
    %v2028 = vmul.f32 %v2003, %v1804
    %v2029 = vmul.f32 %v2005, %v1805
    %v2030 = vmul.f32 %v1985, %v2010
    %v2031 = vmul.f32 %v1987, %v2011
    %v2032 = vadd.f32 %v2028, %v2030
    %v2033 = vadd.f32 %v2029, %v2031
    %v2034 = vtanh.pop %v2032
    %v2035 = vtanh.pop %v2033
    %v2036 = vmul.f32 %v2025, %v2034
    %v2037 = vmul.f32 %v2027, %v2035
    %v2038 = vmul.f32 %v2036, %v658
    %v2039 = vmul.f32 %v2037, %v665
    %v2042 = vcombine.low %v2038, %v2039
    %v2044 = vunpack.c.l.s4 1966171168
    %v2045 = vunpack.c.0.s8 %v2044
    %v2046 = vlaneseq
    %v2047 = vshrl.u32 %v2046, 7
    %v2048 = vsub.s32 %v2045, %v2047
    %v2049 = vrot.slane %v2042, %v2048
    %v2051 = vunpack.c.l.s4 1966171168
    %v2052 = vunpack.c.0.s8 %v2051
    %v2053 = vlaneseq
    %v2054 = vshrl.u32 %v2053, 7
    %v2055 = vsub.s32 %v2052, %v2054
    %v2056 = vrot.slane %v2049, %v2055
    %v2058 = vsel %vm688, %v2056, 0.0
    %2059 = vadd.xlane.f32.xlu0 %v2058
    %v2060 = vpop.xlane.xlu0 %2059
    %v2061 = vld [vmem:[%s3 + $0x6] sm:$0x1]
    %v2062 = vlaneseq
    %v2063 = vshrl.u32 %v2062, 7
    %v2064 = vsub.s32 0, %v2063
    %v2065 = vrot.slane %v2061, %v2064
    %v2066 = vmul.f32 %v2060, %v2065
    %v2067 = vadd.f32 %v1839, %v2066
    %s2068 = scalar_lea.vmem [#allocation2], 7
    %v2069 = vld [vmem:[%s2068] ss:$8 sm:$0xf]
    %s2070 = scalar_lea.vmem [#allocation2], 39
    %v2071 = vld [vmem:[%s2070] ss:$8 sm:$0xf]
    %v2072 = vpack.c.bf16 %v2036, %v2036
    %v2073 = vpack.c.bf16 %v2037, %v2037
    %v2076 = vunpack.c.l.b16 %v2072
    %v2077 = vunpack.c.l.b16 %v2073
    %v2078 = vrot.slane %v2077, 7
    %v2079 = vsel %vm710, %v2078, %v2076
    %v2080 = vpack.c.b16 %v2079, %v2079
    %2082 = vmatprep.subr.bf16.mxu0 %v424
    %2083 = vmatpush1.bf16.msra.mxu0 %v423
    %2084 = vmatprep.subr.bf16.mxu0 %v420
    %2085 = vmatpush1.bf16.msra.mxu0 %v419
    %2086 = vmatprep.subr.bf16.mxu0 %v416
    %2087 = vmatpush1.bf16.msra.mxu0 %v415
    %2088 = vmatprep.subr.bf16.mxu0 %v412
    %2089 = vmatpush1.bf16.msra.mxu0 %v411
    %2090 = vmatprep.subr.bf16.mxu0 %v408
    %2091 = vmatpush1.bf16.msra.mxu0 %v407
    %2092 = vmatprep.subr.bf16.mxu0 %v404
    %2093 = vmatpush1.bf16.msra.mxu0 %v403
    %2094 = vmatprep.subr.bf16.mxu0 %v400
    %2095 = vmatpush1.bf16.msra.mxu0 %v399
    %2096 = vmatprep.subr.bf16.mxu0 %v396
    %2097 = vmatpush1.bf16.msra.mxu0 %v395
    %2098 = vmatprep.subr.bf16.mxu0 0
    %2099 = vmatpush2.bf16.msra.mxu0 0
    %2100 = vmatprep.subr.bf16.mxu0 0
    %2101 = vmatpush2.bf16.msra.mxu0 0
    %2102 = vmatprep.subr.bf16.mxu0 0
    %2103 = vmatpush2.bf16.msra.mxu0 0
    %2104 = vmatprep.subr.bf16.mxu0 0
    %2105 = vmatpush2.bf16.msra.mxu0 0
    %2106 = vmatprep.subr.bf16.mxu0 0
    %2107 = vmatpush2.bf16.msra.mxu0 0
    %2108 = vmatprep.subr.bf16.mxu0 0
    %2109 = vmatpush2.bf16.msra.mxu0 0
    %2110 = vmatprep.subr.bf16.mxu0 0
    %2111 = vmatpush2.bf16.msra.mxu0 0
    %2112 = vmatprep.subr.bf16.mxu0 0
    %2113 = vmatpush2.bf16.msra.mxu0 0
    %2114 = vmatprep.mubr.bf16.mxu0 0
    %2115 = vmatmul.mubr.bf16.gmra.mxu0 %v2080
    %v2116 = vpop.f32.mrf.mxu0
    %v2117 = vadd.f32 0.0, %v2116
    %v2118 = vpop.f32.mrf.mxu0
    %v2119 = vadd.f32 0.0, %v2118
    %v2120 = vpop.f32.mrf.mxu0
    %v2121 = vpop.f32.mrf.mxu0
    %2122 = vdwg.mxu0
    %2123 = vmatprep.subr.bf16.mxu0 %v426
    %2124 = vmatpush1.bf16.msra.mxu0 %v425
    %2125 = vmatprep.subr.bf16.mxu0 %v422
    %2126 = vmatpush1.bf16.msra.mxu0 %v421
    %2127 = vmatprep.subr.bf16.mxu0 %v418
    %2128 = vmatpush1.bf16.msra.mxu0 %v417
    %2129 = vmatprep.subr.bf16.mxu0 %v414
    %2130 = vmatpush1.bf16.msra.mxu0 %v413
    %2131 = vmatprep.subr.bf16.mxu0 %v410
    %2132 = vmatpush1.bf16.msra.mxu0 %v409
    %2133 = vmatprep.subr.bf16.mxu0 %v406
    %2134 = vmatpush1.bf16.msra.mxu0 %v405
    %2135 = vmatprep.subr.bf16.mxu0 %v402
    %2136 = vmatpush1.bf16.msra.mxu0 %v401
    %2137 = vmatprep.subr.bf16.mxu0 %v398
    %2138 = vmatpush1.bf16.msra.mxu0 %v397
    %2139 = vmatprep.subr.bf16.mxu0 0
    %2140 = vmatpush2.bf16.msra.mxu0 0
    %2141 = vmatprep.subr.bf16.mxu0 0
    %2142 = vmatpush2.bf16.msra.mxu0 0
    %2143 = vmatprep.subr.bf16.mxu0 0
    %2144 = vmatpush2.bf16.msra.mxu0 0
    %2145 = vmatprep.subr.bf16.mxu0 0
    %2146 = vmatpush2.bf16.msra.mxu0 0
    %2147 = vmatprep.subr.bf16.mxu0 0
    %2148 = vmatpush2.bf16.msra.mxu0 0
    %2149 = vmatprep.subr.bf16.mxu0 0
    %2150 = vmatpush2.bf16.msra.mxu0 0
    %2151 = vmatprep.subr.bf16.mxu0 0
    %2152 = vmatpush2.bf16.msra.mxu0 0
    %2153 = vmatprep.subr.bf16.mxu0 0
    %2154 = vmatpush2.bf16.msra.mxu0 0
    %2155 = vmatprep.mubr.bf16.mxu0 0
    %2156 = vmatmul.mubr.bf16.gmra.mxu0 %v2080
    %v2157 = vpop.f32.mrf.mxu0
    %v2158 = vadd.f32 0.0, %v2157
    %v2159 = vpop.f32.mrf.mxu0
    %v2160 = vadd.f32 0.0, %v2159
    %v2161 = vpop.f32.mrf.mxu0
    %v2162 = vpop.f32.mrf.mxu0
    %2163 = vdwg.mxu0
    %v2168 = vcombine.low %v2117, %v2119
    %v2169 = vcombine.low %v2158, %v2160
    %v2171 = vunpack.c.l.s4 1966171168
    %v2172 = vunpack.c.0.s8 %v2171
    %v2173 = vlaneseq
    %v2174 = vshrl.u32 %v2173, 7
    %v2175 = vsub.s32 %v2172, %v2174
    %v2176 = vrot.slane %v2168, %v2175
    %v2178 = vunpack.c.l.s4 1966171168
    %v2179 = vunpack.c.0.s8 %v2178
    %v2180 = vlaneseq
    %v2181 = vshrl.u32 %v2180, 7
    %v2182 = vsub.s32 %v2179, %v2181
    %v2183 = vrot.slane %v2169, %v2182
    %v2184 = vcombine.low %v2176, %v2183
    %v2185 = vcombine.high %v2176, %v2183
    %v2187 = vunpack.c.l.s4 1966171168
    %v2188 = vunpack.c.0.s8 %v2187
    %v2189 = vlaneseq
    %v2190 = vshrl.u32 %v2189, 7
    %v2191 = vsub.s32 %v2188, %v2190
    %v2192 = vrot.slane %v2184, %v2191
    %v2194 = vunpack.c.l.s4 1966171168
    %v2195 = vunpack.c.0.s8 %v2194
    %v2196 = vlaneseq
    %v2197 = vshrl.u32 %v2196, 7
    %v2198 = vsub.s32 %v2195, %v2197
    %v2199 = vrot.slane %v2185, %v2198
    %v2202 = vadd.f32 %v2069, %v2192
    %v2203 = vadd.f32 %v2071, %v2199
    %v2204 = vxor.u32 %v2202, 2147483648
    %v2205 = vxor.u32 %v2203, 2147483648
    %v2206 = vmul.f32 %v2204, 1.442695
    %v2207 = vpow.pop %v2206
    %v2208 = vmul.f32 %v2205, 1.442695
    %v2209 = vpow.pop %v2208
    %v2210 = vadd.f32 %v2207, 1.0
    %v2211 = vadd.f32 %v2209, 1.0
    %v2212 = vrcp.pop %v2210
    %v2213 = vmul.f32 1.0, %v2212
    %v2214 = vrcp.pop %v2211
    %v2215 = vmul.f32 1.0, %v2214
    %v2218 = vrot.slane %v2202, 1
    %v2219 = vrot.slane %v2203, 1
    %v2222 = vxor.u32 %v2218, 2147483648
    %v2223 = vxor.u32 %v2219, 2147483648
    %v2224 = vmul.f32 %v2222, 1.442695
    %v2225 = vpow.pop %v2224
    %v2226 = vmul.f32 %v2223, 1.442695
    %v2227 = vpow.pop %v2226
    %v2228 = vadd.f32 %v2225, 1.0
    %v2229 = vadd.f32 %v2227, 1.0
    %v2230 = vrcp.pop %v2228
    %v2231 = vmul.f32 1.0, %v2230
    %v2232 = vrcp.pop %v2229
    %v2233 = vmul.f32 1.0, %v2232
    %v2234 = vrot.slane %v2202, 2
    %v2235 = vrot.slane %v2203, 2
    %v2238 = vtanh.pop %v2234
    %v2239 = vtanh.pop %v2235
    %v2240 = vrot.slane %v2202, 3
    %v2241 = vrot.slane %v2203, 3
    %v2244 = vxor.u32 %v2240, 2147483648
    %v2245 = vxor.u32 %v2241, 2147483648
    %v2246 = vmul.f32 %v2244, 1.442695
    %v2247 = vpow.pop %v2246
    %v2248 = vmul.f32 %v2245, 1.442695
    %v2249 = vpow.pop %v2248
    %v2250 = vadd.f32 %v2247, 1.0
    %v2251 = vadd.f32 %v2249, 1.0
    %v2252 = vrcp.pop %v2250
    %v2253 = vmul.f32 1.0, %v2252
    %v2254 = vrcp.pop %v2251
    %v2255 = vmul.f32 1.0, %v2254
    %v2256 = vmul.f32 %v2231, %v2032
    %v2257 = vmul.f32 %v2233, %v2033
    %v2258 = vmul.f32 %v2213, %v2238
    %v2259 = vmul.f32 %v2215, %v2239
    %v2260 = vadd.f32 %v2256, %v2258
    %v2261 = vadd.f32 %v2257, %v2259
    %v2262 = vtanh.pop %v2260
    %v2263 = vtanh.pop %v2261
    %v2264 = vmul.f32 %v2253, %v2262
    %v2265 = vmul.f32 %v2255, %v2263
    %v2266 = vmul.f32 %v2264, %v658
    %v2267 = vmul.f32 %v2265, %v665
    %v2270 = vcombine.low %v2266, %v2267
    %v2272 = vunpack.c.l.s4 1966171168
    %v2273 = vunpack.c.0.s8 %v2272
    %v2274 = vlaneseq
    %v2275 = vshrl.u32 %v2274, 7
    %v2276 = vsub.s32 %v2273, %v2275
    %v2277 = vrot.slane %v2270, %v2276
    %v2279 = vunpack.c.l.s4 1966171168
    %v2280 = vunpack.c.0.s8 %v2279
    %v2281 = vlaneseq
    %v2282 = vshrl.u32 %v2281, 7
    %v2283 = vsub.s32 %v2280, %v2282
    %v2284 = vrot.slane %v2277, %v2283
    %v2286 = vsel %vm688, %v2284, 0.0
    %2287 = vadd.xlane.f32.xlu0 %v2286
    %v2288 = vpop.xlane.xlu0 %2287
    %v2289 = vld [vmem:[%s3 + $0x7] sm:$0x1]
    %v2290 = vlaneseq
    %v2291 = vshrl.u32 %v2290, 7
    %v2292 = vsub.s32 0, %v2291
    %v2293 = vrot.slane %v2289, %v2292
    %v2294 = vmul.f32 %v2288, %v2293
    %v2295 = vadd.f32 %v2067, %v2294
    %vm2296 = vcmask 25600
    %2297 = vst.msk [vmem:[#allocation9] sm:$0x3] %vm2296, %v2295
    // Predicated region
    $region30: #{model_forward.1} parent=1 // pred_check
      _
    $region31: #{model_forward.1} parent=1 // pred_check_branch
      %2299 = sbr.rel (0) target = $region33
    $region32: #{model_forward.1} parent=1 // pred_region
      %s2301 = ssub.s32 32, 32
      %2302 = vsyncadd [#allocation5], %s2301
      %s2304 = sshll.u32 [#allocation9], 4
      %s2305 = int_to_ptr.vmem [resolvable:$true] %s2304
      %2307 = dma.vmem_to_hbm [thread:$0]  %s2305, 32, %s4, [#allocation5]
    $region33: #{model_forward.1} parent=1 // pred_fallthru
      _
    // Predicated region
    $region34: #{model_forward.1} parent=1 // pred_check
      _
    $region35: #{model_forward.1} parent=1 // pred_check_branch
      %2309 = sbr.rel (0) target = $region37
    $region36: #{model_forward.1} parent=1 // pred_region
      %2310 = dma.done [#allocation5], 32
    $region37: #{model_forward.1} parent=1 // pred_fallthru
      _
    %2311 = vsyncpa [#allocation4], 1
    %2312 = vsyncpa [#allocation7], 1
    %2313 = vsyncpa [#allocation5], 1

</llo_original>
